<compile_context>
chip_gen: v7x
topology: tpu7x:2x2x1
jax: 0.10.0
libtpu: 0.0.40
codegen_flags: <defaults>
</compile_context>

<pallas_src>
import functools

import jax
import jax.numpy as jnp
from jax import lax
from jax.experimental import pallas as pl
from jax.experimental.pallas import tpu as pltpu

BN_EPS = 1e-5  # PyTorch BatchNorm1d default


def _round_up(x, m):
    return (x + m - 1) // m * m


def _cross_corr_loss_kernel(z1t_ref, z2_ref, loss_ref, g_acc,
                            *, inv_div, lambd, d_valid):
    i = pl.program_id(0)
    j = pl.program_id(1)
    k = pl.program_id(2)
    nk = pl.num_programs(2)

    @pl.when(k == 0)
    def _init():
        g_acc[...] = jnp.zeros_like(g_acc)

    # (tm, tk) @ (tk, tn) on the MXU: bf16 operands, f32 accumulation.  The
    # inputs are already BatchNorm-normalized, so this Gram tile *is* the
    # (unscaled) cross-correlation tile.
    g_acc[...] += jnp.dot(z1t_ref[...], z2_ref[...],
                          preferred_element_type=jnp.float32)

    @pl.when(k == nk - 1)
    def _finalize():
        c = g_acc[...] * inv_div                                   # (tm, tn) f32
        tm, tn = c.shape

        # Every tile contributes lambd * sum(c^2).  Reduce over sublanes only
        # and store a lane-dense (1, tn) partial; the wrapper finishes the sum.
        part = lambd * jnp.sum(c * c, axis=0, keepdims=True)       # (1, tn)
        loss_ref[...] = part.reshape(loss_ref.shape)

        # Diagonal correction only on block-diagonal tiles (masked for feature
        # padding): sum_d [(c_dd - 1)^2 - lambd * c_dd^2].
        @pl.when(i == j)
        def _diag():
            row = lax.broadcasted_iota(jnp.int32, (tm, tn), 0)
            col = lax.broadcasted_iota(jnp.int32, (tm, tn), 1)
            on_mask = (row == col) & ((row + i * tm) < d_valid)
            corr = jnp.sum(
                jnp.where(on_mask, (c - 1.0) ** 2 - lambd * (c * c), 0.0),
                axis=0, keepdims=True)                             # (1, tn)
            loss_ref[...] = loss_ref[...] + corr.reshape(loss_ref.shape)


def cross_corr_loss(z1, z2, *, lambd, batch_size=None,
                    tm=512, tn=512, tk=512, vmem_limit_bytes=None):
    """Barlow-Twins cross-correlation loss.  z1, z2: (batch, rep_size) -> scalar f32."""
    assert z1.ndim == 2 and z1.shape == z2.shape
    b, d = z1.shape
    if batch_size is None:
        batch_size = b
    assert tm == tn, "diagonal correction requires square c tiles"
    assert tm % 128 == 0 and tn % 128 == 0

    # BatchNorm1d(affine=False) with batch statistics (biased variance,
    # eps=1e-5), computed once per input in f32 in the wrapper.  The kernel
    # then only has to accumulate the Gram matrix of the normalized bf16 data.
    def _bn(z):
        z = z.astype(jnp.float32)
        mean = jnp.mean(z, axis=0, keepdims=True)
        zc = z - mean
        var = jnp.mean(zc * zc, axis=0, keepdims=True)
        return zc * lax.rsqrt(var + BN_EPS)

    z1n = _bn(z1)
    z2n = _bn(z2)

    # Feature (c) tiles: clamp to the 128-padded feature count.
    d_pad128 = _round_up(d, 128)
    tm = tn = min(tm, d_pad128)
    d_pad = _round_up(d, tm)

    # Batch (contraction) tile.  bf16 blocks need tk % 16 == 0 for the (tk, tn)
    # z2 block's sublane axis, and tk % 128 == 0 (or tk == padded batch) for the
    # (tm, tk) z1.T block's lane axis.
    tk = _round_up(tk, 128)
    b_pad16 = _round_up(b, 16)
    if b_pad16 <= tk:
        tk = b_pad16
        b_pad = b_pad16
    else:
        b_pad = _round_up(b, tk)

    # Zero padding is exact: padded batch rows of the *normalized* activations
    # contribute 0 to every Gram entry; padded feature columns give c == 0 and
    # are masked out of the diagonal term.
    z1t = jnp.pad(z1n.T, ((0, d_pad - d), (0, b_pad - b))).astype(jnp.bfloat16)
    z2p = jnp.pad(z2n, ((0, b_pad - b), (0, d_pad - d))).astype(jnp.bfloat16)

    n_i, n_j, n_k = d_pad // tm, d_pad // tn, b_pad // tk

    if vmem_limit_bytes is None:
        need = (2 * 2 * (tm * tk + tk * tn)   # double-buffered bf16 input tiles
                + tm * tn * 4                 # f32 Gram accumulator
                + 2 * tn * 4)                 # double-buffered lane-partial out
        budget = 2 * need                     # headroom for compiler scratch
        if budget > 16 * 1024 * 1024:         # smallest scoped default (v5e)
            vmem_limit_bytes = min(budget, 64 * 1024 * 1024)

    kernel = functools.partial(
        _cross_corr_loss_kernel,
        inv_div=1.0 / float(batch_size),  # c.div_(batch_size) uses the module argument
        lambd=float(lambd),
        d_valid=int(d))

    partials = pl.pallas_call(
        kernel,
        out_shape=jax.ShapeDtypeStruct((n_i, n_j, 1, tn), jnp.float32),
        grid_spec=pltpu.PrefetchScalarGridSpec(
            num_scalar_prefetch=0,
            grid=(n_i, n_j, n_k),
            in_specs=[
                pl.BlockSpec((tm, tk), lambda i, j, k: (i, k)),   # z1.T tile
                pl.BlockSpec((tk, tn), lambda i, j, k: (k, j)),   # z2   tile
            ],
            out_specs=pl.BlockSpec((1, 1, 1, tn), lambda i, j, k: (i, j, 0, 0)),
            scratch_shapes=[pltpu.VMEM((tm, tn), jnp.float32)]),  # Gram accumulator
        compiler_params=pltpu.CompilerParams(
            dimension_semantics=("parallel", "parallel", "arbitrary"),
            vmem_limit_bytes=vmem_limit_bytes),
    )(z1t, z2p)

    # TODO(synk): torch.distributed.all_reduce(c) is an identity on a single
    # device; a multi-chip sum of c would need a remote-DMA collective.
    return jnp.sum(partials)


def _reference(z1, z2, *, lambd, batch_size):
    def _bn(z):
        mean = jnp.mean(z, axis=0, keepdims=True)
        var = jnp.mean((z - mean) ** 2, axis=0, keepdims=True)
        return (z - mean) / jnp.sqrt(var + BN_EPS)

    c = _bn(z1).T @ _bn(z2) / batch_size
    on_diag = jnp.sum((jnp.diag(c) - 1.0) ** 2)
    off = c - jnp.diag(jnp.diag(c))
    return on_diag + lambd * jnp.sum(off ** 2)


if __name__ == "__main__":
    lambd = 0.0051  # Barlow Twins default
    key = jax.random.PRNGKey(0)

    # Case 1: aligned 256x256, non-zero feature means (exercises f32 centering
    # before the bf16 cast), two k (batch) accumulation steps.
    b1, d1 = 256, 256
    k1, k2, key = jax.random.split(key, 3)
    z1 = jax.random.normal(k1, (b1, d1), dtype=jnp.float32) * 0.5 + 1.5
    z2 = jax.random.normal(k2, (b1, d1), dtype=jnp.float32) * 2.0 - 0.7
    loss = jax.block_until_ready(
        cross_corr_loss(z1, z2, lambd=lambd, batch_size=b1, tk=128))
    ref = _reference(z1, z2, lambd=lambd, batch_size=b1)
    assert jnp.allclose(loss, ref, rtol=2e-2, atol=2e-2), (loss, ref)

    # Case 2: ragged 48x200 with tm=tn=128 -> 2x2 (i, j) grid, batch & feature
    # padding and per-tile diagonal masking.
    b2, d2 = 48, 200
    k3, k4, key = jax.random.split(key, 3)
    z1b = jax.random.normal(k3, (b2, d2), dtype=jnp.float32)
    z2b = jax.random.normal(k4, (b2, d2), dtype=jnp.float32)
    loss2 = jax.block_until_ready(
        cross_corr_loss(z1b, z2b, lambd=lambd, batch_size=b2, tm=128, tn=128))
    ref2 = _reference(z1b, z2b, lambd=lambd, batch_size=b2)
    assert jnp.allclose(loss2, ref2, rtol=2e-2, atol=2e-2), (loss2, ref2)

    print("KERNEL_OK")
</pallas_src>

<mosaic_0001>
module attributes {stable_mosaic.version = 11 : i64} {
  func.func @_cross_corr_loss_kernel(%arg0: i32, %arg1: i32, %arg2: i32, %arg3: memref<256x128xbf16, #tpu.memory_space<vmem>>, %arg4: memref<128x256xbf16, #tpu.memory_space<vmem>>, %arg5: memref<1x1x1x256xf32, #tpu.memory_space<vmem>>, %arg6: memref<256x256xf32, #tpu.memory_space<vmem>>) attributes {dimension_semantics = [#tpu.dimension_semantics<parallel>, #tpu.dimension_semantics<parallel>, #tpu.dimension_semantics<arbitrary>], iteration_bounds = array<i64: 1, 1, 2>, scalar_prefetch = 0 : i64, scratch_operands = 1 : i64, tpu.core_type = #tpu.core_type<tc>, window_params = [{transform_indices = @transform_0, window_bounds = array<i64: 256, 128>}, {transform_indices = @transform_1, window_bounds = array<i64: 128, 256>}, {transform_indices = @transform_2, window_bounds = array<i64: 1, 1, 1, 256>}]} {
    %c0_i32 = arith.constant 0 : i32
    %0 = arith.cmpi eq, %arg2, %c0_i32 : i32
    %1 = arith.extui %0 : i1 to i32
    %c0_i32_0 = arith.constant 0 : i32
    %2 = arith.cmpi ne, %1, %c0_i32_0 : i32
    scf.if %2 {
      %cst_9 = arith.constant 0.000000e+00 : f32
      %12 = vector.broadcast %cst_9 : f32 to vector<256x256xf32>
      %c0_10 = arith.constant 0 : index
      %c0_11 = arith.constant 0 : index
      %13 = vector.load %arg6[%c0_10, %c0_11] : memref<256x256xf32, #tpu.memory_space<vmem>>, vector<256x256xf32>
      tpu.vector_store %arg6[%c0_10, %c0_11], %12 {strides = array<i32>} : memref<256x256xf32, #tpu.memory_space<vmem>>, vector<256x256xf32>,
    } else {
    }
    %c0 = arith.constant 0 : index
    %c0_1 = arith.constant 0 : index
    %3 = vector.load %arg6[%c0, %c0_1] : memref<256x256xf32, #tpu.memory_space<vmem>>, vector<256x256xf32>
    %c0_2 = arith.constant 0 : index
    %c0_3 = arith.constant 0 : index
    %4 = vector.load %arg3[%c0_2, %c0_3] : memref<256x128xbf16, #tpu.memory_space<vmem>>, vector<256x128xbf16>
    %c0_4 = arith.constant 0 : index
    %c0_5 = arith.constant 0 : index
    %5 = vector.load %arg4[%c0_4, %c0_5] : memref<128x256xbf16, #tpu.memory_space<vmem>>, vector<128x256xbf16>
    %cst = arith.constant dense<0.000000e+00> : vector<256x256xf32>
    %6 = tpu.matmul %4, %5, %cst {dimension_numbers = #tpu.dot_dimension_numbers<[1], [0], [0], [1], [0, 0, 1, 1], [], []>} : vector<256x128xbf16>, vector<128x256xbf16>, vector<256x256xf32> -> vector<256x256xf32>
    %7 = arith.addf %3, %6 : vector<256x256xf32>
    %c0_6 = arith.constant 0 : index
    %c0_7 = arith.constant 0 : index
    %8 = vector.load %arg6[%c0_6, %c0_7] : memref<256x256xf32, #tpu.memory_space<vmem>>, vector<256x256xf32>
    tpu.vector_store %arg6[%c0_6, %c0_7], %7 {strides = array<i32>} : memref<256x256xf32, #tpu.memory_space<vmem>>, vector<256x256xf32>,
    %c1_i32 = arith.constant 1 : i32
    %9 = arith.cmpi eq, %arg2, %c1_i32 : i32
    %10 = arith.extui %9 : i1 to i32
    %c0_i32_8 = arith.constant 0 : i32
    %11 = arith.cmpi ne, %10, %c0_i32_8 : i32
    scf.if %11 {
      %c0_9 = arith.constant 0 : index
      %c0_10 = arith.constant 0 : index
      %12 = vector.load %arg6[%c0_9, %c0_10] : memref<256x256xf32, #tpu.memory_space<vmem>>, vector<256x256xf32>
      %cst_11 = arith.constant 3.906250e-03 : f32
      %13 = vector.broadcast %cst_11 : f32 to vector<256x256xf32>
      %14 = arith.mulf %12, %13 : vector<256x256xf32>
      %15 = arith.mulf %14, %14 : vector<256x256xf32>
      %cst_12 = arith.constant dense<0.000000e+00> : vector<256xf32>
      %16 = vector.multi_reduction <add>, %15, %cst_12 [0] : vector<256x256xf32> to vector<256xf32>
      %17 = vector.shape_cast %16 : vector<256xf32> to vector<1x256xf32>
      %cst_13 = arith.constant 5.100000e-03 : f32
      %18 = vector.broadcast %cst_13 : f32 to vector<1x256xf32>
      %19 = arith.mulf %18, %17 : vector<1x256xf32>
      %20 = vector.shape_cast %19 : vector<1x256xf32> to vector<1x1x1x256xf32>
      %c0_14 = arith.constant 0 : index
      %c0_15 = arith.constant 0 : index
      %c0_16 = arith.constant 0 : index
      %c0_17 = arith.constant 0 : index
      %21 = vector.load %arg5[%c0_14, %c0_15, %c0_16, %c0_17] : memref<1x1x1x256xf32, #tpu.memory_space<vmem>>, vector<1x1x1x256xf32>
      tpu.vector_store %arg5[%c0_14, %c0_15, %c0_16, %c0_17], %20 {strides = array<i32>} : memref<1x1x1x256xf32, #tpu.memory_space<vmem>>, vector<1x1x1x256xf32>,
      %22 = arith.cmpi eq, %arg0, %arg1 : i32
      %23 = arith.extui %22 : i1 to i32
      %c0_i32_18 = arith.constant 0 : i32
      %24 = arith.cmpi ne, %23, %c0_i32_18 : i32
      scf.if %24 {
        %25 = tpu.iota {dimensions = array<i32: 0>} : vector<256x256xi32>
        %26 = tpu.iota {dimensions = array<i32: 1>} : vector<256x256xi32>
        %27 = arith.cmpi eq, %25, %26 : vector<256x256xi32>
        %c256_i32 = arith.constant 256 : i32
        %28 = arith.muli %arg0, %c256_i32 : i32
        %29 = vector.broadcast %28 : i32 to vector<256x256xi32>
        %30 = arith.addi %25, %29 : vector<256x256xi32>
        %c256_i32_19 = arith.constant 256 : i32
        %31 = vector.broadcast %c256_i32_19 : i32 to vector<256x256xi32>
        %32 = arith.cmpi slt, %30, %31 : vector<256x256xi32>
        %33 = arith.andi %27, %32 : vector<256x256xi1>
        %cst_20 = arith.constant 1.000000e+00 : f32
        %34 = vector.broadcast %cst_20 : f32 to vector<256x256xf32>
        %35 = arith.subf %14, %34 : vector<256x256xf32>
        %36 = arith.mulf %35, %35 : vector<256x256xf32>
        %37 = arith.mulf %14, %14 : vector<256x256xf32>
        %cst_21 = arith.constant 5.100000e-03 : f32
        %38 = vector.broadcast %cst_21 : f32 to vector<256x256xf32>
        %39 = arith.mulf %38, %37 : vector<256x256xf32>
        %40 = arith.subf %36, %39 : vector<256x256xf32>
        %cst_22 = arith.constant 0.000000e+00 : f32
        %41 = vector.broadcast %cst_22 : f32 to vector<256x256xf32>
        %42 = arith.select %33, %40, %41 : vector<256x256xi1>, vector<256x256xf32>
        %cst_23 = arith.constant dense<0.000000e+00> : vector<256xf32>
        %43 = vector.multi_reduction <add>, %42, %cst_23 [0] : vector<256x256xf32> to vector<256xf32>
        %44 = vector.shape_cast %43 : vector<256xf32> to vector<1x256xf32>
        %c0_24 = arith.constant 0 : index
        %c0_25 = arith.constant 0 : index
        %c0_26 = arith.constant 0 : index
        %c0_27 = arith.constant 0 : index
        %45 = vector.load %arg5[%c0_24, %c0_25, %c0_26, %c0_27] : memref<1x1x1x256xf32, #tpu.memory_space<vmem>>, vector<1x1x1x256xf32>
        %46 = vector.shape_cast %44 : vector<1x256xf32> to vector<1x1x1x256xf32>
        %47 = arith.addf %45, %46 : vector<1x1x1x256xf32>
        %c0_28 = arith.constant 0 : index
        %c0_29 = arith.constant 0 : index
        %c0_30 = arith.constant 0 : index
        %c0_31 = arith.constant 0 : index
        %48 = vector.load %arg5[%c0_28, %c0_29, %c0_30, %c0_31] : memref<1x1x1x256xf32, #tpu.memory_space<vmem>>, vector<1x1x1x256xf32>
        tpu.vector_store %arg5[%c0_28, %c0_29, %c0_30, %c0_31], %47 {strides = array<i32>} : memref<1x1x1x256xf32, #tpu.memory_space<vmem>>, vector<1x1x1x256xf32>,
      } else {
      }
    } else {
    }
    return
  }
  func.func @transform_0(%arg0: i32, %arg1: i32, %arg2: i32) -> (i32, i32) {
    %c0_i32 = arith.constant 0 : i32
    return %arg0, %arg2 : i32, i32
  }
  func.func @transform_1(%arg0: i32, %arg1: i32, %arg2: i32) -> (i32, i32) {
    %c0_i32 = arith.constant 0 : i32
    return %arg2, %arg1 : i32, i32
  }
  func.func @transform_2(%arg0: i32, %arg1: i32, %arg2: i32) -> (i32, i32, i32, i32) {
    %c0_i32 = arith.constant 0 : i32
    %c0_i32_0 = arith.constant 0 : i32
    %c0_i32_1 = arith.constant 0 : i32
    return %arg0, %arg1, %c0_i32, %c0_i32_0 : i32, i32, i32, i32
  }
}

</mosaic_0001>

<llo_original>
// kernel: tpu_custom_call.1
$region0: #{tpu_custom_call.1}
  #allocation0 [shape = 'u32[]', space=smem, size = 0x4, offset = 0x4, fixed_abs, tag = 'smem constant byte address 0x4 - core index']
  #allocation1 [shape = 'u32[144,128]{1,0:T(1,128)}', space=vmem, size = 0x12000, scoped, tag = 'internal scratch']
  #allocation2 [shape = 'f32[256,256]{1,0:T(8,128)}', space=vmem, size = 0x40000, scoped, tag = 'scratch operand']
  %s0 = inlined_call_operand.hbm [shape: bf16[256,256], index: 0, kind: input, shape index: {}]
  %s1 = inlined_call_operand.hbm [shape: bf16[256,256], index: 1, kind: input, shape index: {}]
  %s2 = inlined_call_operand.hbm [shape: f32[1,1,1,256], index: 2, kind: output, shape index: {}]
  %s3 = sld [smem:[#allocation0]]
  $region61: #{tpu_custom_call.1} parent=0
    _
  %s5 = ssub.s32 1, %s3
  %s6 = scalar_select 0, %s5, %s3
  $region1: #{tpu_custom_call.1} parent=0
    #allocation3 [shape = 'u8[131072]{0}', space=vmem, size = 0x20000, scoped, tag = 'input window, operand 0']
    #allocation4 [shape = 's32[2]{0}', space=sflag, size = 0x8, scoped, tag = 'scoped memory for tpu_custom_call.1']
    #allocation5 [shape = 's32[2]{0}', space=sflag, size = 0x8, scoped, tag = 'scoped memory for tpu_custom_call.1']
    #allocation6 [shape = 'u8[131072]{0}', space=vmem, size = 0x20000, scoped, tag = 'input window, operand 1']
    #allocation7 [shape = 's32[2]{0}', space=sflag, size = 0x8, scoped, tag = 'scoped memory for tpu_custom_call.1']
    #allocation8 [shape = 'u8[1024]{0}', space=vmem, size = 0x400, scoped, tag = 'output window, operand 0, single buffered']
    %7 = vsyncpa [#allocation4], 0
    %s8 = scalar_lea.sflag [#allocation4], 1
    %9 = vsyncpa %s8, 0
    %10 = vsyncpa [#allocation7], 0
    %s11 = scalar_lea.sflag [#allocation7], 1
    %12 = vsyncpa %s11, 0
    %13 = vsyncpa [#allocation5], 0
    loop: start=0, step=1, limit=4
    $region2: #{tpu_custom_call.1} parent=1 // loop_pre_header
      _
    $region3: #{tpu_custom_call.1} parent=1 // loop_header
      %s15 = sphi 0, %s19
      %p16 = scmp.ge.s32.totalorder %s15, 4
      %s22 = sphi 0, %s41
      %s23 = sphi 0, %s37
      %s24 = sphi 0, %s33
      %s25 = sphi 0, %s22
      %s26 = sphi 0, %s23
      %s27 = sphi 0, %s24
      %s28 = sphi 0, %s25
      %s29 = sphi 0, %s26
      %s30 = sphi 0, %s27
      %s46 = sphi 0, %s48
      %s49 = sphi 0, %s46
      %s50 = sphi 0, %s49
      %s66 = sphi 0, %s50
      %s74 = sphi 0, %s76
      %s77 = sphi 0, %s74
      %s78 = sphi 0, %s77
      %s94 = sphi 0, %s78
      %s102 = sphi 0, %s104
      %s105 = sphi 0, %s102
      %s106 = sphi 0, %s105
      %s122 = sphi 0, %s106
    $region4: #{tpu_custom_call.1} parent=1 // loop_header_branch
      %18 = sbr.rel (%p16) target = $region8
    $region5: #{tpu_custom_call.1} parent=1 // loop_body
      %s20 = ssub.s32 %s15, 1
      %s21 = ssub.s32 %s15, 2
      %s31 = sadd.s32 1, %s24
      %p32 = scmp.ge.s32.totalorder %s31, 2
      %s33 = scalar_select %p32, 0, %s31
      %s34 = sadd.s32 1, %s23
      %s35 = scalar_select %p32, %s34, %s23
      %p36 = scmp.ge.s32.totalorder %s35, 1
      %s37 = scalar_select %p36, 0, %s35
      %s38 = sadd.s32 1, %s22
      %s39 = scalar_select %p36, %s38, %s22
      %p40 = scmp.ge.s32.totalorder %s39, 1
      %s41 = scalar_select %p40, 0, %s39
      %s42 = ssub.s32 %s22, %s41
      %s43 = ssub.s32 %s24, %s33
      %s44 = sor.u32 %s42, %s43
      %p45 = scmp.eq.s32.totalorder %s44, 0
      %s47 = sadd.s32 %s46, 1
      %s48 = scalar_select %p45, %s46, %s47
      %p51 = pneg %p45
      %p52 = scmp.eq.s32.totalorder %s15, 1
      %p53 = por %p51, %p52
      %p54 = scmp.ne.s32.totalorder %s46, %s49
      %p55 = scmp.eq.s32.totalorder %s15, 0
      %p56 = por %p54, %p55
      %p57 = scmp.ne.s32.totalorder %s46, %s49
      %p58 = scmp.eq.s32.totalorder %s20, 1
      %p59 = por %p57, %p58
      %p60 = scmp.ne.s32.totalorder %s49, %s50
      %p61 = scmp.eq.s32.totalorder %s20, 0
      %p62 = por %p60, %p61
      %p63 = scmp.ne.s32.totalorder %s49, %s50
      %p64 = scmp.eq.s32.totalorder %s21, 1
      %p65 = por %p63, %p64
      %p67 = scmp.ne.s32.totalorder %s50, %s66
      %p68 = scmp.eq.s32.totalorder %s21, 0
      %p69 = por %p67, %p68
      %s70 = ssub.s32 %s24, %s33
      %s71 = ssub.s32 %s23, %s37
      %s72 = sor.u32 %s70, %s71
      %p73 = scmp.eq.s32.totalorder %s72, 0
      %s75 = sadd.s32 %s74, 1
      %s76 = scalar_select %p73, %s74, %s75
      %p79 = pneg %p73
      %p80 = scmp.eq.s32.totalorder %s15, 1
      %p81 = por %p79, %p80
      %p82 = scmp.ne.s32.totalorder %s74, %s77
      %p83 = scmp.eq.s32.totalorder %s15, 0
      %p84 = por %p82, %p83
      %p85 = scmp.ne.s32.totalorder %s74, %s77
      %p86 = scmp.eq.s32.totalorder %s20, 1
      %p87 = por %p85, %p86
      %p88 = scmp.ne.s32.totalorder %s77, %s78
      %p89 = scmp.eq.s32.totalorder %s20, 0
      %p90 = por %p88, %p89
      %p91 = scmp.ne.s32.totalorder %s77, %s78
      %p92 = scmp.eq.s32.totalorder %s21, 1
      %p93 = por %p91, %p92
      %p95 = scmp.ne.s32.totalorder %s78, %s94
      %p96 = scmp.eq.s32.totalorder %s21, 0
      %p97 = por %p95, %p96
      %s98 = ssub.s32 %s22, %s41
      %s99 = ssub.s32 %s23, %s37
      %s100 = sor.u32 %s98, %s99
      %p101 = scmp.eq.s32.totalorder %s100, 0
      %s103 = sadd.s32 %s102, 1
      %s104 = scalar_select %p101, %s102, %s103
      %p107 = pneg %p101
      %p108 = scmp.eq.s32.totalorder %s15, 1
      %p109 = por %p107, %p108
      %p110 = scmp.ne.s32.totalorder %s102, %s105
      %p111 = scmp.eq.s32.totalorder %s15, 0
      %p112 = por %p110, %p111
      %p113 = scmp.ne.s32.totalorder %s102, %s105
      %p114 = scmp.eq.s32.totalorder %s20, 1
      %p115 = por %p113, %p114
      %p116 = scmp.ne.s32.totalorder %s105, %s106
      %p117 = scmp.eq.s32.totalorder %s20, 0
      %p118 = por %p116, %p117
      %p119 = scmp.ne.s32.totalorder %s105, %s106
      %p120 = scmp.eq.s32.totalorder %s21, 1
      %p121 = por %p119, %p120
      %p123 = scmp.ne.s32.totalorder %s106, %s122
      %p124 = scmp.eq.s32.totalorder %s21, 0
      %p125 = por %p123, %p124
      %p126 = scmp.le.s32.totalorder 1, %s15
      %p127 = scmp.lt.s32.totalorder %s15, 3
      %p128 = pnand %p126, %p127
      %p129 = pneg %p128
      // Predicated region
      $region9: #{tpu_custom_call.1} parent=5 // pred_check
        _
      $region10: #{tpu_custom_call.1} parent=5 // pred_check_branch
        %131 = sbr.rel (%p128) target = $region12
      $region11: #{tpu_custom_call.1} parent=5 // pred_region
        %s132 = ssub.s32 %s15, 1
      $region12: #{tpu_custom_call.1} parent=5 // pred_fallthru
        _
      %p133 = scmp.lt.s32.totalorder %s15, 2
      // Predicated region
      $region13: #{tpu_custom_call.1} parent=5 // pred_check
        %p134 = pneg %p133
      $region14: #{tpu_custom_call.1} parent=5 // pred_check_branch
        %136 = sbr.rel (%p134) target = $region16
      $region15: #{tpu_custom_call.1} parent=5 // pred_region
        // Predicated region
        $region17: #{tpu_custom_call.1} parent=15 // pred_check
          %p137 = pneg %p56
        $region18: #{tpu_custom_call.1} parent=15 // pred_check_branch
          %139 = sbr.rel (%p137) target = $region20
        $region19: #{tpu_custom_call.1} parent=15 // pred_region
          %s140 = sand.u32 %s46, 1
          %s141 = scalar_lea.sflag [#allocation4], %s140
          %s142 = sand.u32 %s46, 1
          %s143 = smul.addr %s142, 128
          %s144 = scalar_lea.vmem [#allocation3], %s143
          %s145 = smul.u32 32, %s22
          %s147 = ssub.s32 2048, 2048
          %148 = vsyncadd %s141, %s147
          %s149 = smul.addr %s145, 2
          %s150 = sadd.s32 %s24, %s149
          %s151 = smul.addr %s150, 64
          %s152 = scalar_lea.hbm %s0, %s151
          %s153 = sshll.u32 %s144, 4
          %s154 = int_to_ptr.vmem [resolvable:$true] %s153
          %159 = dma.hbm_to_vmem [thread:$0]  %s152, 2048, %s154, %s141, 128, 64, 4
        $region20: #{tpu_custom_call.1} parent=15 // pred_fallthru
          _
        // Predicated region
        $region21: #{tpu_custom_call.1} parent=15 // pred_check
          %p160 = pneg %p84
        $region22: #{tpu_custom_call.1} parent=15 // pred_check_branch
          %162 = sbr.rel (%p160) target = $region24
        $region23: #{tpu_custom_call.1} parent=15 // pred_region
          %s163 = sand.u32 %s74, 1
          %s164 = scalar_lea.sflag [#allocation7], %s163
          %s165 = sand.u32 %s74, 1
          %s166 = smul.addr %s165, 128
          %s167 = scalar_lea.vmem [#allocation6], %s166
          %s168 = smul.u32 16, %s24
          %s169 = smul.u32 2, %s23
          %s171 = ssub.s32 2048, 2048
          %172 = vsyncadd %s164, %s171
          %s173 = smul.addr %s168, 2
          %s174 = sadd.s32 %s169, %s173
          %s175 = smul.addr %s174, 64
          %s176 = scalar_lea.hbm %s1, %s175
          %s177 = sshll.u32 %s167, 4
          %s178 = int_to_ptr.vmem [resolvable:$true] %s177
          %183 = dma.hbm_to_vmem [thread:$0]  %s176, 2048, %s178, %s164, 128, 128, 8
        $region24: #{tpu_custom_call.1} parent=15 // pred_fallthru
          _
      $region16: #{tpu_custom_call.1} parent=5 // pred_fallthru
        _
      %p184 = scmp.le.s32.totalorder 1, %s15
      %p185 = scmp.lt.s32.totalorder %s15, 3
      %p186 = pnand %p184, %p185
      %p187 = pneg %p186
      // Predicated region
      $region25: #{tpu_custom_call.1} parent=5 // pred_check
        _
      $region26: #{tpu_custom_call.1} parent=5 // pred_check_branch
        %189 = sbr.rel (%p186) target = $region28
      $region27: #{tpu_custom_call.1} parent=5 // pred_region
        %s190 = ssub.s32 %s15, 1
        %s191 = sand.u32 %s49, 1
        %s192 = scalar_lea.sflag [#allocation4], %s191
        %s193 = sand.u32 %s49, 1
        %s194 = smul.addr %s193, 128
        %s195 = scalar_lea.vmem [#allocation3], %s194
        // Predicated region
        $region29: #{tpu_custom_call.1} parent=27 // pred_check
          %p196 = pneg %p62
        $region30: #{tpu_custom_call.1} parent=27 // pred_check_branch
          %198 = sbr.rel (%p196) target = $region32
        $region31: #{tpu_custom_call.1} parent=27 // pred_region
          %199 = dma.done %s192, 2048
        $region32: #{tpu_custom_call.1} parent=27 // pred_fallthru
          _
        %s200 = sand.u32 %s77, 1
        %s201 = scalar_lea.sflag [#allocation7], %s200
        %s202 = sand.u32 %s77, 1
        %s203 = smul.addr %s202, 128
        %s204 = scalar_lea.vmem [#allocation6], %s203
        // Predicated region
        $region33: #{tpu_custom_call.1} parent=27 // pred_check
          %p205 = pneg %p90
        $region34: #{tpu_custom_call.1} parent=27 // pred_check_branch
          %207 = sbr.rel (%p205) target = $region36
        $region35: #{tpu_custom_call.1} parent=27 // pred_region
          %208 = dma.done %s201, 2048
        $region36: #{tpu_custom_call.1} parent=27 // pred_fallthru
          _
        %s209 = sand.u32 %s49, 1
        %s210 = scalar_lea.sflag [#allocation4], %s209
        %s211 = sand.u32 %s49, 1
        %s212 = smul.addr %s211, 128
        %s213 = scalar_lea.vmem [#allocation3], %s212
        %p214 = pneg %p62
        %p215 = pneg %p59
        %s216 = sand.u32 %s77, 1
        %s217 = scalar_lea.sflag [#allocation7], %s216
        %s218 = sand.u32 %s77, 1
        %s219 = smul.addr %s218, 128
        %s220 = scalar_lea.vmem [#allocation6], %s219
        %p221 = pneg %p90
        %p222 = pneg %p87
        %p223 = pneg %p118
        %p224 = pneg %p115
        %s225 = smul.u32 32, %s25
        %s226 = smul.u32 16, %s27
        %s227 = smul.u32 2, %s26
        %p229 = scmp.eq.s32.totalorder %s27, 0
        // Predicated region
        $region37: #{tpu_custom_call.1} parent=27 // pred_check
          %p230 = pneg %p229
        $region38: #{tpu_custom_call.1} parent=27 // pred_check_branch
          %232 = sbr.rel (%p230) target = $region40
        $region39: #{tpu_custom_call.1} parent=27 // pred_region
          %233 = vst [vmem:[#allocation2] sm:$0xff] 0.0
          %234 = vst [vmem:[#allocation2 + $0x8] sm:$0xff] 0.0
          %235 = vst [vmem:[#allocation2 + $0x10] sm:$0xff] 0.0
          %236 = vst [vmem:[#allocation2 + $0x18] sm:$0xff] 0.0
          %237 = vst [vmem:[#allocation2 + $0x20] sm:$0xff] 0.0
          %238 = vst [vmem:[#allocation2 + $0x28] sm:$0xff] 0.0
          %239 = vst [vmem:[#allocation2 + $0x30] sm:$0xff] 0.0
          %240 = vst [vmem:[#allocation2 + $0x38] sm:$0xff] 0.0
          %241 = vst [vmem:[#allocation2 + $0x40] sm:$0xff] 0.0
          %242 = vst [vmem:[#allocation2 + $0x48] sm:$0xff] 0.0
          %243 = vst [vmem:[#allocation2 + $0x50] sm:$0xff] 0.0
          %244 = vst [vmem:[#allocation2 + $0x58] sm:$0xff] 0.0
          %245 = vst [vmem:[#allocation2 + $0x60] sm:$0xff] 0.0
          %246 = vst [vmem:[#allocation2 + $0x68] sm:$0xff] 0.0
          %247 = vst [vmem:[#allocation2 + $0x70] sm:$0xff] 0.0
          %248 = vst [vmem:[#allocation2 + $0x78] sm:$0xff] 0.0
          %249 = vst [vmem:[#allocation2 + $0x80] sm:$0xff] 0.0
          %250 = vst [vmem:[#allocation2 + $0x88] sm:$0xff] 0.0
          %251 = vst [vmem:[#allocation2 + $0x90] sm:$0xff] 0.0
          %252 = vst [vmem:[#allocation2 + $0x98] sm:$0xff] 0.0
          %253 = vst [vmem:[#allocation2 + $0xa0] sm:$0xff] 0.0
          %254 = vst [vmem:[#allocation2 + $0xa8] sm:$0xff] 0.0
          %255 = vst [vmem:[#allocation2 + $0xb0] sm:$0xff] 0.0
          %256 = vst [vmem:[#allocation2 + $0xb8] sm:$0xff] 0.0
          %257 = vst [vmem:[#allocation2 + $0xc0] sm:$0xff] 0.0
          %258 = vst [vmem:[#allocation2 + $0xc8] sm:$0xff] 0.0
          %259 = vst [vmem:[#allocation2 + $0xd0] sm:$0xff] 0.0
          %260 = vst [vmem:[#allocation2 + $0xd8] sm:$0xff] 0.0
          %261 = vst [vmem:[#allocation2 + $0xe0] sm:$0xff] 0.0
          %262 = vst [vmem:[#allocation2 + $0xe8] sm:$0xff] 0.0
          %263 = vst [vmem:[#allocation2 + $0xf0] sm:$0xff] 0.0
          %264 = vst [vmem:[#allocation2 + $0xf8] sm:$0xff] 0.0
          %265 = vst [vmem:[#allocation2 + $0x100] sm:$0xff] 0.0
          %266 = vst [vmem:[#allocation2 + $0x108] sm:$0xff] 0.0
          %267 = vst [vmem:[#allocation2 + $0x110] sm:$0xff] 0.0
          %268 = vst [vmem:[#allocation2 + $0x118] sm:$0xff] 0.0
          %269 = vst [vmem:[#allocation2 + $0x120] sm:$0xff] 0.0
          %270 = vst [vmem:[#allocation2 + $0x128] sm:$0xff] 0.0
          %271 = vst [vmem:[#allocation2 + $0x130] sm:$0xff] 0.0
          %272 = vst [vmem:[#allocation2 + $0x138] sm:$0xff] 0.0
          %273 = vst [vmem:[#allocation2 + $0x140] sm:$0xff] 0.0
          %274 = vst [vmem:[#allocation2 + $0x148] sm:$0xff] 0.0
          %275 = vst [vmem:[#allocation2 + $0x150] sm:$0xff] 0.0
          %276 = vst [vmem:[#allocation2 + $0x158] sm:$0xff] 0.0
          %277 = vst [vmem:[#allocation2 + $0x160] sm:$0xff] 0.0
          %278 = vst [vmem:[#allocation2 + $0x168] sm:$0xff] 0.0
          %279 = vst [vmem:[#allocation2 + $0x170] sm:$0xff] 0.0
          %280 = vst [vmem:[#allocation2 + $0x178] sm:$0xff] 0.0
          %281 = vst [vmem:[#allocation2 + $0x180] sm:$0xff] 0.0
          %282 = vst [vmem:[#allocation2 + $0x188] sm:$0xff] 0.0
          %283 = vst [vmem:[#allocation2 + $0x190] sm:$0xff] 0.0
          %284 = vst [vmem:[#allocation2 + $0x198] sm:$0xff] 0.0
          %285 = vst [vmem:[#allocation2 + $0x1a0] sm:$0xff] 0.0
          %286 = vst [vmem:[#allocation2 + $0x1a8] sm:$0xff] 0.0
          %287 = vst [vmem:[#allocation2 + $0x1b0] sm:$0xff] 0.0
          %288 = vst [vmem:[#allocation2 + $0x1b8] sm:$0xff] 0.0
          %289 = vst [vmem:[#allocation2 + $0x1c0] sm:$0xff] 0.0
          %290 = vst [vmem:[#allocation2 + $0x1c8] sm:$0xff] 0.0
          %291 = vst [vmem:[#allocation2 + $0x1d0] sm:$0xff] 0.0
          %292 = vst [vmem:[#allocation2 + $0x1d8] sm:$0xff] 0.0
          %293 = vst [vmem:[#allocation2 + $0x1e0] sm:$0xff] 0.0
          %294 = vst [vmem:[#allocation2 + $0x1e8] sm:$0xff] 0.0
          %295 = vst [vmem:[#allocation2 + $0x1f0] sm:$0xff] 0.0
          %296 = vst [vmem:[#allocation2 + $0x1f8] sm:$0xff] 0.0
        $region40: #{tpu_custom_call.1} parent=27 // pred_fallthru
          _
        %v297 = vld [vmem:[#allocation2] sm:$0xff]
        %v298 = vld [vmem:[#allocation2 + $0x8] sm:$0xff]
        %v299 = vld [vmem:[#allocation2 + $0x10] sm:$0xff]
        %v300 = vld [vmem:[#allocation2 + $0x18] sm:$0xff]
        %v301 = vld [vmem:[#allocation2 + $0x20] sm:$0xff]
        %v302 = vld [vmem:[#allocation2 + $0x28] sm:$0xff]
        %v303 = vld [vmem:[#allocation2 + $0x30] sm:$0xff]
        %v304 = vld [vmem:[#allocation2 + $0x38] sm:$0xff]
        %v305 = vld [vmem:[#allocation2 + $0x40] sm:$0xff]
        %v306 = vld [vmem:[#allocation2 + $0x48] sm:$0xff]
        %v307 = vld [vmem:[#allocation2 + $0x50] sm:$0xff]
        %v308 = vld [vmem:[#allocation2 + $0x58] sm:$0xff]
        %v309 = vld [vmem:[#allocation2 + $0x60] sm:$0xff]
        %v310 = vld [vmem:[#allocation2 + $0x68] sm:$0xff]
        %v311 = vld [vmem:[#allocation2 + $0x70] sm:$0xff]
        %v312 = vld [vmem:[#allocation2 + $0x78] sm:$0xff]
        %v313 = vld [vmem:[#allocation2 + $0x80] sm:$0xff]
        %v314 = vld [vmem:[#allocation2 + $0x88] sm:$0xff]
        %v315 = vld [vmem:[#allocation2 + $0x90] sm:$0xff]
        %v316 = vld [vmem:[#allocation2 + $0x98] sm:$0xff]
        %v317 = vld [vmem:[#allocation2 + $0xa0] sm:$0xff]
        %v318 = vld [vmem:[#allocation2 + $0xa8] sm:$0xff]
        %v319 = vld [vmem:[#allocation2 + $0xb0] sm:$0xff]
        %v320 = vld [vmem:[#allocation2 + $0xb8] sm:$0xff]
        %v321 = vld [vmem:[#allocation2 + $0xc0] sm:$0xff]
        %v322 = vld [vmem:[#allocation2 + $0xc8] sm:$0xff]
        %v323 = vld [vmem:[#allocation2 + $0xd0] sm:$0xff]
        %v324 = vld [vmem:[#allocation2 + $0xd8] sm:$0xff]
        %v325 = vld [vmem:[#allocation2 + $0xe0] sm:$0xff]
        %v326 = vld [vmem:[#allocation2 + $0xe8] sm:$0xff]
        %v327 = vld [vmem:[#allocation2 + $0xf0] sm:$0xff]
        %v328 = vld [vmem:[#allocation2 + $0xf8] sm:$0xff]
        %v329 = vld [vmem:[#allocation2 + $0x100] sm:$0xff]
        %v330 = vld [vmem:[#allocation2 + $0x108] sm:$0xff]
        %v331 = vld [vmem:[#allocation2 + $0x110] sm:$0xff]
        %v332 = vld [vmem:[#allocation2 + $0x118] sm:$0xff]
        %v333 = vld [vmem:[#allocation2 + $0x120] sm:$0xff]
        %v334 = vld [vmem:[#allocation2 + $0x128] sm:$0xff]
        %v335 = vld [vmem:[#allocation2 + $0x130] sm:$0xff]
        %v336 = vld [vmem:[#allocation2 + $0x138] sm:$0xff]
        %v337 = vld [vmem:[#allocation2 + $0x140] sm:$0xff]
        %v338 = vld [vmem:[#allocation2 + $0x148] sm:$0xff]
        %v339 = vld [vmem:[#allocation2 + $0x150] sm:$0xff]
        %v340 = vld [vmem:[#allocation2 + $0x158] sm:$0xff]
        %v341 = vld [vmem:[#allocation2 + $0x160] sm:$0xff]
        %v342 = vld [vmem:[#allocation2 + $0x168] sm:$0xff]
        %v343 = vld [vmem:[#allocation2 + $0x170] sm:$0xff]
        %v344 = vld [vmem:[#allocation2 + $0x178] sm:$0xff]
        %v345 = vld [vmem:[#allocation2 + $0x180] sm:$0xff]
        %v346 = vld [vmem:[#allocation2 + $0x188] sm:$0xff]
        %v347 = vld [vmem:[#allocation2 + $0x190] sm:$0xff]
        %v348 = vld [vmem:[#allocation2 + $0x198] sm:$0xff]
        %v349 = vld [vmem:[#allocation2 + $0x1a0] sm:$0xff]
        %v350 = vld [vmem:[#allocation2 + $0x1a8] sm:$0xff]
        %v351 = vld [vmem:[#allocation2 + $0x1b0] sm:$0xff]
        %v352 = vld [vmem:[#allocation2 + $0x1b8] sm:$0xff]
        %v353 = vld [vmem:[#allocation2 + $0x1c0] sm:$0xff]
        %v354 = vld [vmem:[#allocation2 + $0x1c8] sm:$0xff]
        %v355 = vld [vmem:[#allocation2 + $0x1d0] sm:$0xff]
        %v356 = vld [vmem:[#allocation2 + $0x1d8] sm:$0xff]
        %v357 = vld [vmem:[#allocation2 + $0x1e0] sm:$0xff]
        %v358 = vld [vmem:[#allocation2 + $0x1e8] sm:$0xff]
        %v359 = vld [vmem:[#allocation2 + $0x1f0] sm:$0xff]
        %v360 = vld [vmem:[#allocation2 + $0x1f8] sm:$0xff]
        %v361 = vld [vmem:[%s195] sm:$0xf]
        %v362 = vld [vmem:[%s195 + $0x4] sm:$0xf]
        %v363 = vld [vmem:[%s195 + $0x8] sm:$0xf]
        %v364 = vld [vmem:[%s195 + $0xc] sm:$0xf]
        %v365 = vld [vmem:[%s195 + $0x10] sm:$0xf]
        %v366 = vld [vmem:[%s195 + $0x14] sm:$0xf]
        %v367 = vld [vmem:[%s195 + $0x18] sm:$0xf]
        %v368 = vld [vmem:[%s195 + $0x1c] sm:$0xf]
        %v369 = vld [vmem:[%s195 + $0x20] sm:$0xf]
        %v370 = vld [vmem:[%s195 + $0x24] sm:$0xf]
        %v371 = vld [vmem:[%s195 + $0x28] sm:$0xf]
        %v372 = vld [vmem:[%s195 + $0x2c] sm:$0xf]
        %v373 = vld [vmem:[%s195 + $0x30] sm:$0xf]
        %v374 = vld [vmem:[%s195 + $0x34] sm:$0xf]
        %v375 = vld [vmem:[%s195 + $0x38] sm:$0xf]
        %v376 = vld [vmem:[%s195 + $0x3c] sm:$0xf]
        %v377 = vld [vmem:[%s195 + $0x40] sm:$0xf]
        %v378 = vld [vmem:[%s195 + $0x44] sm:$0xf]
        %v379 = vld [vmem:[%s195 + $0x48] sm:$0xf]
        %v380 = vld [vmem:[%s195 + $0x4c] sm:$0xf]
        %v381 = vld [vmem:[%s195 + $0x50] sm:$0xf]
        %v382 = vld [vmem:[%s195 + $0x54] sm:$0xf]
        %v383 = vld [vmem:[%s195 + $0x58] sm:$0xf]
        %v384 = vld [vmem:[%s195 + $0x5c] sm:$0xf]
        %v385 = vld [vmem:[%s195 + $0x60] sm:$0xf]
        %v386 = vld [vmem:[%s195 + $0x64] sm:$0xf]
        %v387 = vld [vmem:[%s195 + $0x68] sm:$0xf]
        %v388 = vld [vmem:[%s195 + $0x6c] sm:$0xf]
        %v389 = vld [vmem:[%s195 + $0x70] sm:$0xf]
        %v390 = vld [vmem:[%s195 + $0x74] sm:$0xf]
        %v391 = vld [vmem:[%s195 + $0x78] sm:$0xf]
        %v392 = vld [vmem:[%s195 + $0x7c] sm:$0xf]
        %v393 = vld [vmem:[%s204] sm:$0xff]
        %v394 = vld [vmem:[%s204 + $0x8] sm:$0xff]
        %v395 = vld [vmem:[%s204 + $0x10] sm:$0xff]
        %v396 = vld [vmem:[%s204 + $0x18] sm:$0xff]
        %v397 = vld [vmem:[%s204 + $0x20] sm:$0xff]
        %v398 = vld [vmem:[%s204 + $0x28] sm:$0xff]
        %v399 = vld [vmem:[%s204 + $0x30] sm:$0xff]
        %v400 = vld [vmem:[%s204 + $0x38] sm:$0xff]
        %v401 = vld [vmem:[%s204 + $0x40] sm:$0xff]
        %v402 = vld [vmem:[%s204 + $0x48] sm:$0xff]
        %v403 = vld [vmem:[%s204 + $0x50] sm:$0xff]
        %v404 = vld [vmem:[%s204 + $0x58] sm:$0xff]
        %v405 = vld [vmem:[%s204 + $0x60] sm:$0xff]
        %v406 = vld [vmem:[%s204 + $0x68] sm:$0xff]
        %v407 = vld [vmem:[%s204 + $0x70] sm:$0xff]
        %v408 = vld [vmem:[%s204 + $0x78] sm:$0xff]
        %v441 = vunpack.c.l.b16 %v361
        %v442 = vunpack.c.l.b16 %v362
        %v443 = vunpack.c.l.b16 %v363
        %v444 = vunpack.c.l.b16 %v364
        %v445 = vunpack.c.l.b16 %v365
        %v446 = vunpack.c.l.b16 %v366
        %v447 = vunpack.c.l.b16 %v367
        %v448 = vunpack.c.l.b16 %v368
        %v449 = vunpack.c.l.b16 %v369
        %v450 = vunpack.c.l.b16 %v370
        %v451 = vunpack.c.l.b16 %v371
        %v452 = vunpack.c.l.b16 %v372
        %v453 = vunpack.c.l.b16 %v373
        %v454 = vunpack.c.l.b16 %v374
        %v455 = vunpack.c.l.b16 %v375
        %v456 = vunpack.c.l.b16 %v376
        %v457 = vunpack.c.l.b16 %v377
        %v458 = vunpack.c.l.b16 %v378
        %v459 = vunpack.c.l.b16 %v379
        %v460 = vunpack.c.l.b16 %v380
        %v461 = vunpack.c.l.b16 %v381
        %v462 = vunpack.c.l.b16 %v382
        %v463 = vunpack.c.l.b16 %v383
        %v464 = vunpack.c.l.b16 %v384
        %v465 = vunpack.c.l.b16 %v385
        %v466 = vunpack.c.l.b16 %v386
        %v467 = vunpack.c.l.b16 %v387
        %v468 = vunpack.c.l.b16 %v388
        %v469 = vunpack.c.l.b16 %v389
        %v470 = vunpack.c.l.b16 %v390
        %v471 = vunpack.c.l.b16 %v391
        %v472 = vunpack.c.l.b16 %v392
        %v473 = vpack.c.b16 %v442, %v441
        %v474 = vpack.c.b16 %v444, %v443
        %v475 = vpack.c.b16 %v446, %v445
        %v476 = vpack.c.b16 %v448, %v447
        %v477 = vpack.c.b16 %v450, %v449
        %v478 = vpack.c.b16 %v452, %v451
        %v479 = vpack.c.b16 %v454, %v453
        %v480 = vpack.c.b16 %v456, %v455
        %v481 = vpack.c.b16 %v458, %v457
        %v482 = vpack.c.b16 %v460, %v459
        %v483 = vpack.c.b16 %v462, %v461
        %v484 = vpack.c.b16 %v464, %v463
        %v485 = vpack.c.b16 %v466, %v465
        %v486 = vpack.c.b16 %v468, %v467
        %v487 = vpack.c.b16 %v470, %v469
        %v488 = vpack.c.b16 %v472, %v471
        %v521 = vunpack.c.l.b16 %v393
        %v522 = vunpack.c.h.b16 %v393
        %v523 = vunpack.c.l.b16 %v394
        %v524 = vunpack.c.h.b16 %v394
        %v525 = vunpack.c.l.b16 %v395
        %v526 = vunpack.c.h.b16 %v395
        %v527 = vunpack.c.l.b16 %v396
        %v528 = vunpack.c.h.b16 %v396
        %v529 = vunpack.c.l.b16 %v397
        %v530 = vunpack.c.h.b16 %v397
        %v531 = vunpack.c.l.b16 %v398
        %v532 = vunpack.c.h.b16 %v398
        %v533 = vunpack.c.l.b16 %v399
        %v534 = vunpack.c.h.b16 %v399
        %v535 = vunpack.c.l.b16 %v400
        %v536 = vunpack.c.h.b16 %v400
        %v537 = vunpack.c.l.b16 %v401
        %v538 = vunpack.c.h.b16 %v401
        %v539 = vunpack.c.l.b16 %v402
        %v540 = vunpack.c.h.b16 %v402
        %v541 = vunpack.c.l.b16 %v403
        %v542 = vunpack.c.h.b16 %v403
        %v543 = vunpack.c.l.b16 %v404
        %v544 = vunpack.c.h.b16 %v404
        %v545 = vunpack.c.l.b16 %v405
        %v546 = vunpack.c.h.b16 %v405
        %v547 = vunpack.c.l.b16 %v406
        %v548 = vunpack.c.h.b16 %v406
        %v549 = vunpack.c.l.b16 %v407
        %v550 = vunpack.c.h.b16 %v407
        %v551 = vunpack.c.l.b16 %v408
        %v552 = vunpack.c.h.b16 %v408
        %v553 = vpack.c.b16 %v523, %v521
        %v554 = vpack.c.b16 %v524, %v522
        %v555 = vpack.c.b16 %v527, %v525
        %v556 = vpack.c.b16 %v528, %v526
        %v557 = vpack.c.b16 %v531, %v529
        %v558 = vpack.c.b16 %v532, %v530
        %v559 = vpack.c.b16 %v535, %v533
        %v560 = vpack.c.b16 %v536, %v534
        %v561 = vpack.c.b16 %v539, %v537
        %v562 = vpack.c.b16 %v540, %v538
        %v563 = vpack.c.b16 %v543, %v541
        %v564 = vpack.c.b16 %v544, %v542
        %v565 = vpack.c.b16 %v547, %v545
        %v566 = vpack.c.b16 %v548, %v546
        %v567 = vpack.c.b16 %v551, %v549
        %v568 = vpack.c.b16 %v552, %v550
        %585 = vmatprep.subr.bf16.mxu0 %v554
        %586 = vmatpush1.bf16.msra.mxu0 %v553
        %587 = vmatprep.subr.bf16.mxu0 %v556
        %588 = vmatpush1.bf16.msra.mxu0 %v555
        %589 = vmatprep.subr.bf16.mxu0 %v558
        %590 = vmatpush1.bf16.msra.mxu0 %v557
        %591 = vmatprep.subr.bf16.mxu0 %v560
        %592 = vmatpush1.bf16.msra.mxu0 %v559
        %593 = vmatprep.subr.bf16.mxu0 %v562
        %594 = vmatpush1.bf16.msra.mxu0 %v561
        %595 = vmatprep.subr.bf16.mxu0 %v564
        %596 = vmatpush1.bf16.msra.mxu0 %v563
        %597 = vmatprep.subr.bf16.mxu0 %v566
        %598 = vmatpush1.bf16.msra.mxu0 %v565
        %599 = vmatprep.subr.bf16.mxu0 %v568
        %600 = vmatpush1.bf16.msra.mxu0 %v567
        %601 = vmatprep.subr.bf16.mxu0 0
        %602 = vmatpush1.bf16.msra.mxu0 0
        %603 = vmatprep.subr.bf16.mxu0 0
        %604 = vmatpush1.bf16.msra.mxu0 0
        %605 = vmatprep.subr.bf16.mxu0 0
        %606 = vmatpush1.bf16.msra.mxu0 0
        %607 = vmatprep.subr.bf16.mxu0 0
        %608 = vmatpush1.bf16.msra.mxu0 0
        %609 = vmatprep.subr.bf16.mxu0 0
        %610 = vmatpush1.bf16.msra.mxu0 0
        %611 = vmatprep.subr.bf16.mxu0 0
        %612 = vmatpush1.bf16.msra.mxu0 0
        %613 = vmatprep.subr.bf16.mxu0 0
        %614 = vmatpush1.bf16.msra.mxu0 0
        %615 = vmatprep.subr.bf16.mxu0 0
        %616 = vmatpush1.bf16.msra.mxu0 0
        %617 = vmatprep.mubr.bf16.mxu0 0
        %618 = vmatmul.mubr.bf16.gmra.mrb[0].mxu0 %v473
        %v619 = vpop.f32.mrb[0].mxu0
        %v620 = vadd.f32 0.0, %v619
        %v621 = vpop.f32.mrb[0].mxu0
        %v622 = vadd.f32 0.0, %v621
        %v623 = vpop.f32.mrb[0].mxu0
        %v624 = vadd.f32 0.0, %v623
        %v625 = vpop.f32.mrb[0].mxu0
        %v626 = vadd.f32 0.0, %v625
        %627 = vmatprep.mubr.bf16.mxu0 0
        %628 = vmatmul.mubr.bf16.gmra.mrb[0].mxu0 %v474
        %v629 = vpop.f32.mrb[0].mxu0
        %v630 = vadd.f32 0.0, %v629
        %v631 = vpop.f32.mrb[0].mxu0
        %v632 = vadd.f32 0.0, %v631
        %v633 = vpop.f32.mrb[0].mxu0
        %v634 = vadd.f32 0.0, %v633
        %v635 = vpop.f32.mrb[0].mxu0
        %v636 = vadd.f32 0.0, %v635
        %637 = vmatprep.mubr.bf16.mxu0 0
        %638 = vmatmul.mubr.bf16.gmra.mrb[0].mxu0 %v475
        %v639 = vpop.f32.mrb[0].mxu0
        %v640 = vadd.f32 0.0, %v639
        %v641 = vpop.f32.mrb[0].mxu0
        %v642 = vadd.f32 0.0, %v641
        %v643 = vpop.f32.mrb[0].mxu0
        %v644 = vadd.f32 0.0, %v643
        %v645 = vpop.f32.mrb[0].mxu0
        %v646 = vadd.f32 0.0, %v645
        %647 = vmatprep.mubr.bf16.mxu0 0
        %648 = vmatmul.mubr.bf16.gmra.mrb[0].mxu0 %v476
        %v649 = vpop.f32.mrb[0].mxu0
        %v650 = vadd.f32 0.0, %v649
        %v651 = vpop.f32.mrb[0].mxu0
        %v652 = vadd.f32 0.0, %v651
        %v653 = vpop.f32.mrb[0].mxu0
        %v654 = vadd.f32 0.0, %v653
        %v655 = vpop.f32.mrb[0].mxu0
        %v656 = vadd.f32 0.0, %v655
        %657 = vmatprep.mubr.bf16.mxu0 0
        %658 = vmatmul.mubr.bf16.gmra.mrb[0].mxu0 %v477
        %v659 = vpop.f32.mrb[0].mxu0
        %v660 = vadd.f32 0.0, %v659
        %v661 = vpop.f32.mrb[0].mxu0
        %v662 = vadd.f32 0.0, %v661
        %v663 = vpop.f32.mrb[0].mxu0
        %v664 = vadd.f32 0.0, %v663
        %v665 = vpop.f32.mrb[0].mxu0
        %v666 = vadd.f32 0.0, %v665
        %667 = vmatprep.mubr.bf16.mxu0 0
        %668 = vmatmul.mubr.bf16.gmra.mrb[0].mxu0 %v478
        %v669 = vpop.f32.mrb[0].mxu0
        %v670 = vadd.f32 0.0, %v669
        %v671 = vpop.f32.mrb[0].mxu0
        %v672 = vadd.f32 0.0, %v671
        %v673 = vpop.f32.mrb[0].mxu0
        %v674 = vadd.f32 0.0, %v673
        %v675 = vpop.f32.mrb[0].mxu0
        %v676 = vadd.f32 0.0, %v675
        %677 = vmatprep.mubr.bf16.mxu0 0
        %678 = vmatmul.mubr.bf16.gmra.mrb[0].mxu0 %v479
        %v679 = vpop.f32.mrb[0].mxu0
        %v680 = vadd.f32 0.0, %v679
        %v681 = vpop.f32.mrb[0].mxu0
        %v682 = vadd.f32 0.0, %v681
        %v683 = vpop.f32.mrb[0].mxu0
        %v684 = vadd.f32 0.0, %v683
        %v685 = vpop.f32.mrb[0].mxu0
        %v686 = vadd.f32 0.0, %v685
        %687 = vmatprep.mubr.bf16.mxu0 0
        %688 = vmatmul.mubr.bf16.gmra.mrb[0].mxu0 %v480
        %v689 = vpop.f32.mrb[0].mxu0
        %v690 = vadd.f32 0.0, %v689
        %v691 = vpop.f32.mrb[0].mxu0
        %v692 = vadd.f32 0.0, %v691
        %v693 = vpop.f32.mrb[0].mxu0
        %v694 = vadd.f32 0.0, %v693
        %v695 = vpop.f32.mrb[0].mxu0
        %v696 = vadd.f32 0.0, %v695
        %697 = vmatprep.mubr.bf16.mxu0 0
        %698 = vmatmul.mubr.bf16.gmra.mrb[0].mxu0 %v481
        %v699 = vpop.f32.mrb[0].mxu0
        %v700 = vadd.f32 0.0, %v699
        %v701 = vpop.f32.mrb[0].mxu0
        %v702 = vadd.f32 0.0, %v701
        %v703 = vpop.f32.mrb[0].mxu0
        %v704 = vadd.f32 0.0, %v703
        %v705 = vpop.f32.mrb[0].mxu0
        %v706 = vadd.f32 0.0, %v705
        %707 = vmatprep.mubr.bf16.mxu0 0
        %708 = vmatmul.mubr.bf16.gmra.mrb[0].mxu0 %v482
        %v709 = vpop.f32.mrb[0].mxu0
        %v710 = vadd.f32 0.0, %v709
        %v711 = vpop.f32.mrb[0].mxu0
        %v712 = vadd.f32 0.0, %v711
        %v713 = vpop.f32.mrb[0].mxu0
        %v714 = vadd.f32 0.0, %v713
        %v715 = vpop.f32.mrb[0].mxu0
        %v716 = vadd.f32 0.0, %v715
        %717 = vmatprep.mubr.bf16.mxu0 0
        %718 = vmatmul.mubr.bf16.gmra.mrb[0].mxu0 %v483
        %v719 = vpop.f32.mrb[0].mxu0
        %v720 = vadd.f32 0.0, %v719
        %v721 = vpop.f32.mrb[0].mxu0
        %v722 = vadd.f32 0.0, %v721
        %v723 = vpop.f32.mrb[0].mxu0
        %v724 = vadd.f32 0.0, %v723
        %v725 = vpop.f32.mrb[0].mxu0
        %v726 = vadd.f32 0.0, %v725
        %727 = vmatprep.mubr.bf16.mxu0 0
        %728 = vmatmul.mubr.bf16.gmra.mrb[0].mxu0 %v484
        %v729 = vpop.f32.mrb[0].mxu0
        %v730 = vadd.f32 0.0, %v729
        %v731 = vpop.f32.mrb[0].mxu0
        %v732 = vadd.f32 0.0, %v731
        %v733 = vpop.f32.mrb[0].mxu0
        %v734 = vadd.f32 0.0, %v733
        %v735 = vpop.f32.mrb[0].mxu0
        %v736 = vadd.f32 0.0, %v735
        %737 = vmatprep.mubr.bf16.mxu0 0
        %738 = vmatmul.mubr.bf16.gmra.mrb[0].mxu0 %v485
        %v739 = vpop.f32.mrb[0].mxu0
        %v740 = vadd.f32 0.0, %v739
        %v741 = vpop.f32.mrb[0].mxu0
        %v742 = vadd.f32 0.0, %v741
        %v743 = vpop.f32.mrb[0].mxu0
        %v744 = vadd.f32 0.0, %v743
        %v745 = vpop.f32.mrb[0].mxu0
        %v746 = vadd.f32 0.0, %v745
        %747 = vmatprep.mubr.bf16.mxu0 0
        %748 = vmatmul.mubr.bf16.gmra.mrb[0].mxu0 %v486
        %v749 = vpop.f32.mrb[0].mxu0
        %v750 = vadd.f32 0.0, %v749
        %v751 = vpop.f32.mrb[0].mxu0
        %v752 = vadd.f32 0.0, %v751
        %v753 = vpop.f32.mrb[0].mxu0
        %v754 = vadd.f32 0.0, %v753
        %v755 = vpop.f32.mrb[0].mxu0
        %v756 = vadd.f32 0.0, %v755
        %757 = vmatprep.mubr.bf16.mxu0 0
        %758 = vmatmul.mubr.bf16.gmra.mrb[0].mxu0 %v487
        %v759 = vpop.f32.mrb[0].mxu0
        %v760 = vadd.f32 0.0, %v759
        %v761 = vpop.f32.mrb[0].mxu0
        %v762 = vadd.f32 0.0, %v761
        %v763 = vpop.f32.mrb[0].mxu0
        %v764 = vadd.f32 0.0, %v763
        %v765 = vpop.f32.mrb[0].mxu0
        %v766 = vadd.f32 0.0, %v765
        %767 = vmatprep.mubr.bf16.mxu0 0
        %768 = vmatmul.mubr.bf16.gmra.mrb[0].mxu0 %v488
        %v769 = vpop.f32.mrb[0].mxu0
        %v770 = vadd.f32 0.0, %v769
        %v771 = vpop.f32.mrb[0].mxu0
        %v772 = vadd.f32 0.0, %v771
        %v773 = vpop.f32.mrb[0].mxu0
        %v774 = vadd.f32 0.0, %v773
        %v775 = vpop.f32.mrb[0].mxu0
        %v776 = vadd.f32 0.0, %v775
        %777 = vdwg.mxu0
        %v778 = vadd.f32 %v297, %v620
        %v779 = vadd.f32 %v298, %v622
        %v780 = vadd.f32 %v299, %v624
        %v781 = vadd.f32 %v300, %v626
        %v782 = vadd.f32 %v301, %v630
        %v783 = vadd.f32 %v302, %v632
        %v784 = vadd.f32 %v303, %v634
        %v785 = vadd.f32 %v304, %v636
        %v786 = vadd.f32 %v305, %v640
        %v787 = vadd.f32 %v306, %v642
        %v788 = vadd.f32 %v307, %v644
        %v789 = vadd.f32 %v308, %v646
        %v790 = vadd.f32 %v309, %v650
        %v791 = vadd.f32 %v310, %v652
        %v792 = vadd.f32 %v311, %v654
        %v793 = vadd.f32 %v312, %v656
        %v794 = vadd.f32 %v313, %v660
        %v795 = vadd.f32 %v314, %v662
        %v796 = vadd.f32 %v315, %v664
        %v797 = vadd.f32 %v316, %v666
        %v798 = vadd.f32 %v317, %v670
        %v799 = vadd.f32 %v318, %v672
        %v800 = vadd.f32 %v319, %v674
        %v801 = vadd.f32 %v320, %v676
        %v802 = vadd.f32 %v321, %v680
        %v803 = vadd.f32 %v322, %v682
        %v804 = vadd.f32 %v323, %v684
        %v805 = vadd.f32 %v324, %v686
        %v806 = vadd.f32 %v325, %v690
        %v807 = vadd.f32 %v326, %v692
        %v808 = vadd.f32 %v327, %v694
        %v809 = vadd.f32 %v328, %v696
        %v810 = vadd.f32 %v329, %v700
        %v811 = vadd.f32 %v330, %v702
        %v812 = vadd.f32 %v331, %v704
        %v813 = vadd.f32 %v332, %v706
        %v814 = vadd.f32 %v333, %v710
        %v815 = vadd.f32 %v334, %v712
        %v816 = vadd.f32 %v335, %v714
        %v817 = vadd.f32 %v336, %v716
        %v818 = vadd.f32 %v337, %v720
        %v819 = vadd.f32 %v338, %v722
        %v820 = vadd.f32 %v339, %v724
        %v821 = vadd.f32 %v340, %v726
        %v822 = vadd.f32 %v341, %v730
        %v823 = vadd.f32 %v342, %v732
        %v824 = vadd.f32 %v343, %v734
        %v825 = vadd.f32 %v344, %v736
        %v826 = vadd.f32 %v345, %v740
        %v827 = vadd.f32 %v346, %v742
        %v828 = vadd.f32 %v347, %v744
        %v829 = vadd.f32 %v348, %v746
        %v830 = vadd.f32 %v349, %v750
        %v831 = vadd.f32 %v350, %v752
        %v832 = vadd.f32 %v351, %v754
        %v833 = vadd.f32 %v352, %v756
        %v834 = vadd.f32 %v353, %v760
        %v835 = vadd.f32 %v354, %v762
        %v836 = vadd.f32 %v355, %v764
        %v837 = vadd.f32 %v356, %v766
        %v838 = vadd.f32 %v357, %v770
        %v839 = vadd.f32 %v358, %v772
        %v840 = vadd.f32 %v359, %v774
        %v841 = vadd.f32 %v360, %v776
        %842 = vst [vmem:[#allocation2] sm:$0xff] %v778
        %843 = vst [vmem:[#allocation2 + $0x8] sm:$0xff] %v779
        %844 = vst [vmem:[#allocation2 + $0x10] sm:$0xff] %v780
        %845 = vst [vmem:[#allocation2 + $0x18] sm:$0xff] %v781
        %846 = vst [vmem:[#allocation2 + $0x20] sm:$0xff] %v782
        %847 = vst [vmem:[#allocation2 + $0x28] sm:$0xff] %v783
        %848 = vst [vmem:[#allocation2 + $0x30] sm:$0xff] %v784
        %849 = vst [vmem:[#allocation2 + $0x38] sm:$0xff] %v785
        %850 = vst [vmem:[#allocation2 + $0x40] sm:$0xff] %v786
        %851 = vst [vmem:[#allocation2 + $0x48] sm:$0xff] %v787
        %852 = vst [vmem:[#allocation2 + $0x50] sm:$0xff] %v788
        %853 = vst [vmem:[#allocation2 + $0x58] sm:$0xff] %v789
        %854 = vst [vmem:[#allocation2 + $0x60] sm:$0xff] %v790
        %855 = vst [vmem:[#allocation2 + $0x68] sm:$0xff] %v791
        %856 = vst [vmem:[#allocation2 + $0x70] sm:$0xff] %v792
        %857 = vst [vmem:[#allocation2 + $0x78] sm:$0xff] %v793
        %858 = vst [vmem:[#allocation2 + $0x80] sm:$0xff] %v794
        %859 = vst [vmem:[#allocation2 + $0x88] sm:$0xff] %v795
        %860 = vst [vmem:[#allocation2 + $0x90] sm:$0xff] %v796
        %861 = vst [vmem:[#allocation2 + $0x98] sm:$0xff] %v797
        %862 = vst [vmem:[#allocation2 + $0xa0] sm:$0xff] %v798
        %863 = vst [vmem:[#allocation2 + $0xa8] sm:$0xff] %v799
        %864 = vst [vmem:[#allocation2 + $0xb0] sm:$0xff] %v800
        %865 = vst [vmem:[#allocation2 + $0xb8] sm:$0xff] %v801
        %866 = vst [vmem:[#allocation2 + $0xc0] sm:$0xff] %v802
        %867 = vst [vmem:[#allocation2 + $0xc8] sm:$0xff] %v803
        %868 = vst [vmem:[#allocation2 + $0xd0] sm:$0xff] %v804
        %869 = vst [vmem:[#allocation2 + $0xd8] sm:$0xff] %v805
        %870 = vst [vmem:[#allocation2 + $0xe0] sm:$0xff] %v806
        %871 = vst [vmem:[#allocation2 + $0xe8] sm:$0xff] %v807
        %872 = vst [vmem:[#allocation2 + $0xf0] sm:$0xff] %v808
        %873 = vst [vmem:[#allocation2 + $0xf8] sm:$0xff] %v809
        %874 = vst [vmem:[#allocation2 + $0x100] sm:$0xff] %v810
        %875 = vst [vmem:[#allocation2 + $0x108] sm:$0xff] %v811
        %876 = vst [vmem:[#allocation2 + $0x110] sm:$0xff] %v812
        %877 = vst [vmem:[#allocation2 + $0x118] sm:$0xff] %v813
        %878 = vst [vmem:[#allocation2 + $0x120] sm:$0xff] %v814
        %879 = vst [vmem:[#allocation2 + $0x128] sm:$0xff] %v815
        %880 = vst [vmem:[#allocation2 + $0x130] sm:$0xff] %v816
        %881 = vst [vmem:[#allocation2 + $0x138] sm:$0xff] %v817
        %882 = vst [vmem:[#allocation2 + $0x140] sm:$0xff] %v818
        %883 = vst [vmem:[#allocation2 + $0x148] sm:$0xff] %v819
        %884 = vst [vmem:[#allocation2 + $0x150] sm:$0xff] %v820
        %885 = vst [vmem:[#allocation2 + $0x158] sm:$0xff] %v821
        %886 = vst [vmem:[#allocation2 + $0x160] sm:$0xff] %v822
        %887 = vst [vmem:[#allocation2 + $0x168] sm:$0xff] %v823
        %888 = vst [vmem:[#allocation2 + $0x170] sm:$0xff] %v824
        %889 = vst [vmem:[#allocation2 + $0x178] sm:$0xff] %v825
        %890 = vst [vmem:[#allocation2 + $0x180] sm:$0xff] %v826
        %891 = vst [vmem:[#allocation2 + $0x188] sm:$0xff] %v827
        %892 = vst [vmem:[#allocation2 + $0x190] sm:$0xff] %v828
        %893 = vst [vmem:[#allocation2 + $0x198] sm:$0xff] %v829
        %894 = vst [vmem:[#allocation2 + $0x1a0] sm:$0xff] %v830
        %895 = vst [vmem:[#allocation2 + $0x1a8] sm:$0xff] %v831
        %896 = vst [vmem:[#allocation2 + $0x1b0] sm:$0xff] %v832
        %897 = vst [vmem:[#allocation2 + $0x1b8] sm:$0xff] %v833
        %898 = vst [vmem:[#allocation2 + $0x1c0] sm:$0xff] %v834
        %899 = vst [vmem:[#allocation2 + $0x1c8] sm:$0xff] %v835
        %900 = vst [vmem:[#allocation2 + $0x1d0] sm:$0xff] %v836
        %901 = vst [vmem:[#allocation2 + $0x1d8] sm:$0xff] %v837
        %902 = vst [vmem:[#allocation2 + $0x1e0] sm:$0xff] %v838
        %903 = vst [vmem:[#allocation2 + $0x1e8] sm:$0xff] %v839
        %904 = vst [vmem:[#allocation2 + $0x1f0] sm:$0xff] %v840
        %905 = vst [vmem:[#allocation2 + $0x1f8] sm:$0xff] %v841
        %p906 = scmp.eq.s32.totalorder %s27, 1
        // Predicated region
        $region41: #{tpu_custom_call.1} parent=27 // pred_check
          %p907 = pneg %p906
        $region42: #{tpu_custom_call.1} parent=27 // pred_check_branch
          %909 = sbr.rel (%p907) target = $region44
        $region43: #{tpu_custom_call.1} parent=27 // pred_region
          %v910 = vld [vmem:[#allocation2] sm:$0xff]
          %v911 = vld [vmem:[#allocation2 + $0x8] sm:$0xff]
          %v912 = vld [vmem:[#allocation2 + $0x10] sm:$0xff]
          %v913 = vld [vmem:[#allocation2 + $0x18] sm:$0xff]
          %v914 = vld [vmem:[#allocation2 + $0x20] sm:$0xff]
          %v915 = vld [vmem:[#allocation2 + $0x28] sm:$0xff]
          %v916 = vld [vmem:[#allocation2 + $0x30] sm:$0xff]
          %v917 = vld [vmem:[#allocation2 + $0x38] sm:$0xff]
          %v918 = vld [vmem:[#allocation2 + $0x40] sm:$0xff]
          %v919 = vld [vmem:[#allocation2 + $0x48] sm:$0xff]
          %v920 = vld [vmem:[#allocation2 + $0x50] sm:$0xff]
          %v921 = vld [vmem:[#allocation2 + $0x58] sm:$0xff]
          %v922 = vld [vmem:[#allocation2 + $0x60] sm:$0xff]
          %v923 = vld [vmem:[#allocation2 + $0x68] sm:$0xff]
          %v924 = vld [vmem:[#allocation2 + $0x70] sm:$0xff]
          %v925 = vld [vmem:[#allocation2 + $0x78] sm:$0xff]
          %v926 = vld [vmem:[#allocation2 + $0x80] sm:$0xff]
          %v927 = vld [vmem:[#allocation2 + $0x88] sm:$0xff]
          %v928 = vld [vmem:[#allocation2 + $0x90] sm:$0xff]
          %v929 = vld [vmem:[#allocation2 + $0x98] sm:$0xff]
          %v930 = vld [vmem:[#allocation2 + $0xa0] sm:$0xff]
          %v931 = vld [vmem:[#allocation2 + $0xa8] sm:$0xff]
          %v932 = vld [vmem:[#allocation2 + $0xb0] sm:$0xff]
          %v933 = vld [vmem:[#allocation2 + $0xb8] sm:$0xff]
          %v934 = vld [vmem:[#allocation2 + $0xc0] sm:$0xff]
          %v935 = vld [vmem:[#allocation2 + $0xc8] sm:$0xff]
          %v936 = vld [vmem:[#allocation2 + $0xd0] sm:$0xff]
          %v937 = vld [vmem:[#allocation2 + $0xd8] sm:$0xff]
          %v938 = vld [vmem:[#allocation2 + $0xe0] sm:$0xff]
          %v939 = vld [vmem:[#allocation2 + $0xe8] sm:$0xff]
          %v940 = vld [vmem:[#allocation2 + $0xf0] sm:$0xff]
          %v941 = vld [vmem:[#allocation2 + $0xf8] sm:$0xff]
          %v942 = vld [vmem:[#allocation2 + $0x100] sm:$0xff]
          %v943 = vld [vmem:[#allocation2 + $0x108] sm:$0xff]
          %v944 = vld [vmem:[#allocation2 + $0x110] sm:$0xff]
          %v945 = vld [vmem:[#allocation2 + $0x118] sm:$0xff]
          %v946 = vld [vmem:[#allocation2 + $0x120] sm:$0xff]
          %v947 = vld [vmem:[#allocation2 + $0x128] sm:$0xff]
          %v948 = vld [vmem:[#allocation2 + $0x130] sm:$0xff]
          %v949 = vld [vmem:[#allocation2 + $0x138] sm:$0xff]
          %v950 = vld [vmem:[#allocation2 + $0x140] sm:$0xff]
          %v951 = vld [vmem:[#allocation2 + $0x148] sm:$0xff]
          %v952 = vld [vmem:[#allocation2 + $0x150] sm:$0xff]
          %v953 = vld [vmem:[#allocation2 + $0x158] sm:$0xff]
          %v954 = vld [vmem:[#allocation2 + $0x160] sm:$0xff]
          %v955 = vld [vmem:[#allocation2 + $0x168] sm:$0xff]
          %v956 = vld [vmem:[#allocation2 + $0x170] sm:$0xff]
          %v957 = vld [vmem:[#allocation2 + $0x178] sm:$0xff]
          %v958 = vld [vmem:[#allocation2 + $0x180] sm:$0xff]
          %v959 = vld [vmem:[#allocation2 + $0x188] sm:$0xff]
          %v960 = vld [vmem:[#allocation2 + $0x190] sm:$0xff]
          %v961 = vld [vmem:[#allocation2 + $0x198] sm:$0xff]
          %v962 = vld [vmem:[#allocation2 + $0x1a0] sm:$0xff]
          %v963 = vld [vmem:[#allocation2 + $0x1a8] sm:$0xff]
          %v964 = vld [vmem:[#allocation2 + $0x1b0] sm:$0xff]
          %v965 = vld [vmem:[#allocation2 + $0x1b8] sm:$0xff]
          %v966 = vld [vmem:[#allocation2 + $0x1c0] sm:$0xff]
          %v967 = vld [vmem:[#allocation2 + $0x1c8] sm:$0xff]
          %v968 = vld [vmem:[#allocation2 + $0x1d0] sm:$0xff]
          %v969 = vld [vmem:[#allocation2 + $0x1d8] sm:$0xff]
          %v970 = vld [vmem:[#allocation2 + $0x1e0] sm:$0xff]
          %v971 = vld [vmem:[#allocation2 + $0x1e8] sm:$0xff]
          %v972 = vld [vmem:[#allocation2 + $0x1f0] sm:$0xff]
          %v973 = vld [vmem:[#allocation2 + $0x1f8] sm:$0xff]
          %v974 = vmul.f32 %v910, 0.00390625
          %v975 = vmul.f32 %v911, 0.00390625
          %v976 = vmul.f32 %v912, 0.00390625
          %v977 = vmul.f32 %v913, 0.00390625
          %v978 = vmul.f32 %v914, 0.00390625
          %v979 = vmul.f32 %v915, 0.00390625
          %v980 = vmul.f32 %v916, 0.00390625
          %v981 = vmul.f32 %v917, 0.00390625
          %v982 = vmul.f32 %v918, 0.00390625
          %v983 = vmul.f32 %v919, 0.00390625
          %v984 = vmul.f32 %v920, 0.00390625
          %v985 = vmul.f32 %v921, 0.00390625
          %v986 = vmul.f32 %v922, 0.00390625
          %v987 = vmul.f32 %v923, 0.00390625
          %v988 = vmul.f32 %v924, 0.00390625
          %v989 = vmul.f32 %v925, 0.00390625
          %v990 = vmul.f32 %v926, 0.00390625
          %v991 = vmul.f32 %v927, 0.00390625
          %v992 = vmul.f32 %v928, 0.00390625
          %v993 = vmul.f32 %v929, 0.00390625
          %v994 = vmul.f32 %v930, 0.00390625
          %v995 = vmul.f32 %v931, 0.00390625
          %v996 = vmul.f32 %v932, 0.00390625
          %v997 = vmul.f32 %v933, 0.00390625
          %v998 = vmul.f32 %v934, 0.00390625
          %v999 = vmul.f32 %v935, 0.00390625
          %v1000 = vmul.f32 %v936, 0.00390625
          %v1001 = vmul.f32 %v937, 0.00390625
          %v1002 = vmul.f32 %v938, 0.00390625
          %v1003 = vmul.f32 %v939, 0.00390625
          %v1004 = vmul.f32 %v940, 0.00390625
          %v1005 = vmul.f32 %v941, 0.00390625
          %v1006 = vmul.f32 %v942, 0.00390625
          %v1007 = vmul.f32 %v943, 0.00390625
          %v1008 = vmul.f32 %v944, 0.00390625
          %v1009 = vmul.f32 %v945, 0.00390625
          %v1010 = vmul.f32 %v946, 0.00390625
          %v1011 = vmul.f32 %v947, 0.00390625
          %v1012 = vmul.f32 %v948, 0.00390625
          %v1013 = vmul.f32 %v949, 0.00390625
          %v1014 = vmul.f32 %v950, 0.00390625
          %v1015 = vmul.f32 %v951, 0.00390625
          %v1016 = vmul.f32 %v952, 0.00390625
          %v1017 = vmul.f32 %v953, 0.00390625
          %v1018 = vmul.f32 %v954, 0.00390625
          %v1019 = vmul.f32 %v955, 0.00390625
          %v1020 = vmul.f32 %v956, 0.00390625
          %v1021 = vmul.f32 %v957, 0.00390625
          %v1022 = vmul.f32 %v958, 0.00390625
          %v1023 = vmul.f32 %v959, 0.00390625
          %v1024 = vmul.f32 %v960, 0.00390625
          %v1025 = vmul.f32 %v961, 0.00390625
          %v1026 = vmul.f32 %v962, 0.00390625
          %v1027 = vmul.f32 %v963, 0.00390625
          %v1028 = vmul.f32 %v964, 0.00390625
          %v1029 = vmul.f32 %v965, 0.00390625
          %v1030 = vmul.f32 %v966, 0.00390625
          %v1031 = vmul.f32 %v967, 0.00390625
          %v1032 = vmul.f32 %v968, 0.00390625
          %v1033 = vmul.f32 %v969, 0.00390625
          %v1034 = vmul.f32 %v970, 0.00390625
          %v1035 = vmul.f32 %v971, 0.00390625
          %v1036 = vmul.f32 %v972, 0.00390625
          %v1037 = vmul.f32 %v973, 0.00390625
          %v1038 = vmul.f32 %v974, %v974
          %v1039 = vmul.f32 %v975, %v975
          %v1040 = vmul.f32 %v976, %v976
          %v1041 = vmul.f32 %v977, %v977
          %v1042 = vmul.f32 %v978, %v978
          %v1043 = vmul.f32 %v979, %v979
          %v1044 = vmul.f32 %v980, %v980
          %v1045 = vmul.f32 %v981, %v981
          %v1046 = vmul.f32 %v982, %v982
          %v1047 = vmul.f32 %v983, %v983
          %v1048 = vmul.f32 %v984, %v984
          %v1049 = vmul.f32 %v985, %v985
          %v1050 = vmul.f32 %v986, %v986
          %v1051 = vmul.f32 %v987, %v987
          %v1052 = vmul.f32 %v988, %v988
          %v1053 = vmul.f32 %v989, %v989
          %v1054 = vmul.f32 %v990, %v990
          %v1055 = vmul.f32 %v991, %v991
          %v1056 = vmul.f32 %v992, %v992
          %v1057 = vmul.f32 %v993, %v993
          %v1058 = vmul.f32 %v994, %v994
          %v1059 = vmul.f32 %v995, %v995
          %v1060 = vmul.f32 %v996, %v996
          %v1061 = vmul.f32 %v997, %v997
          %v1062 = vmul.f32 %v998, %v998
          %v1063 = vmul.f32 %v999, %v999
          %v1064 = vmul.f32 %v1000, %v1000
          %v1065 = vmul.f32 %v1001, %v1001
          %v1066 = vmul.f32 %v1002, %v1002
          %v1067 = vmul.f32 %v1003, %v1003
          %v1068 = vmul.f32 %v1004, %v1004
          %v1069 = vmul.f32 %v1005, %v1005
          %v1070 = vmul.f32 %v1006, %v1006
          %v1071 = vmul.f32 %v1007, %v1007
          %v1072 = vmul.f32 %v1008, %v1008
          %v1073 = vmul.f32 %v1009, %v1009
          %v1074 = vmul.f32 %v1010, %v1010
          %v1075 = vmul.f32 %v1011, %v1011
          %v1076 = vmul.f32 %v1012, %v1012
          %v1077 = vmul.f32 %v1013, %v1013
          %v1078 = vmul.f32 %v1014, %v1014
          %v1079 = vmul.f32 %v1015, %v1015
          %v1080 = vmul.f32 %v1016, %v1016
          %v1081 = vmul.f32 %v1017, %v1017
          %v1082 = vmul.f32 %v1018, %v1018
          %v1083 = vmul.f32 %v1019, %v1019
          %v1084 = vmul.f32 %v1020, %v1020
          %v1085 = vmul.f32 %v1021, %v1021
          %v1086 = vmul.f32 %v1022, %v1022
          %v1087 = vmul.f32 %v1023, %v1023
          %v1088 = vmul.f32 %v1024, %v1024
          %v1089 = vmul.f32 %v1025, %v1025
          %v1090 = vmul.f32 %v1026, %v1026
          %v1091 = vmul.f32 %v1027, %v1027
          %v1092 = vmul.f32 %v1028, %v1028
          %v1093 = vmul.f32 %v1029, %v1029
          %v1094 = vmul.f32 %v1030, %v1030
          %v1095 = vmul.f32 %v1031, %v1031
          %v1096 = vmul.f32 %v1032, %v1032
          %v1097 = vmul.f32 %v1033, %v1033
          %v1098 = vmul.f32 %v1034, %v1034
          %v1099 = vmul.f32 %v1035, %v1035
          %v1100 = vmul.f32 %v1036, %v1036
          %v1101 = vmul.f32 %v1037, %v1037
          %v1102 = vadd.f32 %v1038, %v1040
          %v1103 = vadd.f32 %v1102, %v1042
          %v1104 = vadd.f32 %v1103, %v1044
          %v1105 = vadd.f32 %v1104, %v1046
          %v1106 = vadd.f32 %v1105, %v1048
          %v1107 = vadd.f32 %v1106, %v1050
          %v1108 = vadd.f32 %v1107, %v1052
          %v1109 = vadd.f32 %v1108, %v1054
          %v1110 = vadd.f32 %v1109, %v1056
          %v1111 = vadd.f32 %v1110, %v1058
          %v1112 = vadd.f32 %v1111, %v1060
          %v1113 = vadd.f32 %v1112, %v1062
          %v1114 = vadd.f32 %v1113, %v1064
          %v1115 = vadd.f32 %v1114, %v1066
          %v1116 = vadd.f32 %v1115, %v1068
          %v1117 = vadd.f32 %v1116, %v1070
          %v1118 = vadd.f32 %v1117, %v1072
          %v1119 = vadd.f32 %v1118, %v1074
          %v1120 = vadd.f32 %v1119, %v1076
          %v1121 = vadd.f32 %v1120, %v1078
          %v1122 = vadd.f32 %v1121, %v1080
          %v1123 = vadd.f32 %v1122, %v1082
          %v1124 = vadd.f32 %v1123, %v1084
          %v1125 = vadd.f32 %v1124, %v1086
          %v1126 = vadd.f32 %v1125, %v1088
          %v1127 = vadd.f32 %v1126, %v1090
          %v1128 = vadd.f32 %v1127, %v1092
          %v1129 = vadd.f32 %v1128, %v1094
          %v1130 = vadd.f32 %v1129, %v1096
          %v1131 = vadd.f32 %v1130, %v1098
          %v1132 = vadd.f32 %v1131, %v1100
          %v1133 = vrot.slane %v1132, 4
          %v1134 = vadd.f32 %v1132, %v1133
          %v1135 = vrot.slane %v1134, 2
          %v1136 = vadd.f32 %v1134, %v1135
          %v1137 = vrot.slane %v1136, 1
          %v1138 = vadd.f32 %v1136, %v1137
          %v1139 = vadd.f32 %v1039, %v1041
          %v1140 = vadd.f32 %v1139, %v1043
          %v1141 = vadd.f32 %v1140, %v1045
          %v1142 = vadd.f32 %v1141, %v1047
          %v1143 = vadd.f32 %v1142, %v1049
          %v1144 = vadd.f32 %v1143, %v1051
          %v1145 = vadd.f32 %v1144, %v1053
          %v1146 = vadd.f32 %v1145, %v1055
          %v1147 = vadd.f32 %v1146, %v1057
          %v1148 = vadd.f32 %v1147, %v1059
          %v1149 = vadd.f32 %v1148, %v1061
          %v1150 = vadd.f32 %v1149, %v1063
          %v1151 = vadd.f32 %v1150, %v1065
          %v1152 = vadd.f32 %v1151, %v1067
          %v1153 = vadd.f32 %v1152, %v1069
          %v1154 = vadd.f32 %v1153, %v1071
          %v1155 = vadd.f32 %v1154, %v1073
          %v1156 = vadd.f32 %v1155, %v1075
          %v1157 = vadd.f32 %v1156, %v1077
          %v1158 = vadd.f32 %v1157, %v1079
          %v1159 = vadd.f32 %v1158, %v1081
          %v1160 = vadd.f32 %v1159, %v1083
          %v1161 = vadd.f32 %v1160, %v1085
          %v1162 = vadd.f32 %v1161, %v1087
          %v1163 = vadd.f32 %v1162, %v1089
          %v1164 = vadd.f32 %v1163, %v1091
          %v1165 = vadd.f32 %v1164, %v1093
          %v1166 = vadd.f32 %v1165, %v1095
          %v1167 = vadd.f32 %v1166, %v1097
          %v1168 = vadd.f32 %v1167, %v1099
          %v1169 = vadd.f32 %v1168, %v1101
          %v1170 = vrot.slane %v1169, 4
          %v1171 = vadd.f32 %v1169, %v1170
          %v1172 = vrot.slane %v1171, 2
          %v1173 = vadd.f32 %v1171, %v1172
          %v1174 = vrot.slane %v1173, 1
          %v1175 = vadd.f32 %v1173, %v1174
          %v1176 = vmul.f32 %v1138, 0.0051
          %v1177 = vmul.f32 %v1175, 0.0051
          %v1180 = vcombine.low %v1176, %v1177
          %v1182 = vunpack.c.l.s4 1966171168
          %v1183 = vunpack.c.0.s8 %v1182
          %v1184 = vlaneseq
          %v1185 = vshrl.u32 %v1184, 7
          %v1186 = vsub.s32 %v1183, %v1185
          %v1187 = vrot.slane %v1180, %v1186
          %v1189 = vunpack.c.l.s4 1966171168
          %v1190 = vunpack.c.0.s8 %v1189
          %v1191 = vlaneseq
          %v1192 = vshrl.u32 %v1191, 7
          %v1193 = vsub.s32 %v1190, %v1192
          %v1194 = vrot.slane %v1187, %v1193
          %v1196 = vlaneseq
          %vm1197 = vcmp.ge.s32.totalorder %v1196, 0
          %vm1198 = vcmp.lt.s32.totalorder %v1196, 256
          %vm1199 = vmand %vm1197, %vm1198
          %1200 = vst.msk [vmem:[#allocation8] sm:$0x3] %vm1199, %v1194
          %p1201 = scmp.eq.s32.totalorder %s25, %s26
          // Predicated region
          $region45: #{tpu_custom_call.1} parent=43 // pred_check
            %p1202 = pneg %p1201
          $region46: #{tpu_custom_call.1} parent=43 // pred_check_branch
            %1204 = sbr.rel (%p1202) target = $region48
          $region47: #{tpu_custom_call.1} parent=43 // pred_region
            %v1205 = vlaneseq
            %v1206 = vshrl.u32 %v1205, 7
            %v1207 = vadd.s32 %v1206, 8
            %v1208 = vadd.s32 %v1206, 16
            %v1209 = vadd.s32 %v1206, 24
            %v1210 = vadd.s32 %v1206, 32
            %v1211 = vadd.s32 %v1206, 40
            %v1212 = vadd.s32 %v1206, 48
            %v1213 = vadd.s32 %v1206, 56
            %v1214 = vadd.s32 %v1206, 64
            %v1215 = vadd.s32 %v1206, 72
            %v1216 = vadd.s32 %v1206, 80
            %v1217 = vadd.s32 %v1206, 88
            %v1218 = vadd.s32 %v1206, 96
            %v1219 = vadd.s32 %v1206, 104
            %v1220 = vadd.s32 %v1206, 112
            %v1221 = vadd.s32 %v1206, 120
            %v1222 = vadd.s32 %v1206, 128
            %v1223 = vadd.s32 %v1206, 136
            %v1224 = vadd.s32 %v1206, 144
            %v1225 = vadd.s32 %v1206, 152
            %v1226 = vadd.s32 %v1206, 160
            %v1227 = vadd.s32 %v1206, 168
            %v1228 = vadd.s32 %v1206, 176
            %v1229 = vadd.s32 %v1206, 184
            %v1230 = vadd.s32 %v1206, 192
            %v1231 = vadd.s32 %v1206, 200
            %v1232 = vadd.s32 %v1206, 208
            %v1233 = vadd.s32 %v1206, 216
            %v1234 = vadd.s32 %v1206, 224
            %v1235 = vadd.s32 %v1206, 232
            %v1236 = vadd.s32 %v1206, 240
            %v1237 = vadd.s32 %v1206, 248
            %v1238 = vlaneseq
            %v1239 = vand.u32 %v1238, 127
            %v1240 = vadd.s32 %v1239, 128
            %vm1241 = vcmp.eq.s32.totalorder %v1206, %v1239
            %vm1242 = vcmp.eq.s32.totalorder %v1206, %v1240
            %vm1243 = vcmp.eq.s32.totalorder %v1207, %v1239
            %vm1244 = vcmp.eq.s32.totalorder %v1207, %v1240
            %vm1245 = vcmp.eq.s32.totalorder %v1208, %v1239
            %vm1246 = vcmp.eq.s32.totalorder %v1208, %v1240
            %vm1247 = vcmp.eq.s32.totalorder %v1209, %v1239
            %vm1248 = vcmp.eq.s32.totalorder %v1209, %v1240
            %vm1249 = vcmp.eq.s32.totalorder %v1210, %v1239
            %vm1250 = vcmp.eq.s32.totalorder %v1210, %v1240
            %vm1251 = vcmp.eq.s32.totalorder %v1211, %v1239
            %vm1252 = vcmp.eq.s32.totalorder %v1211, %v1240
            %vm1253 = vcmp.eq.s32.totalorder %v1212, %v1239
            %vm1254 = vcmp.eq.s32.totalorder %v1212, %v1240
            %vm1255 = vcmp.eq.s32.totalorder %v1213, %v1239
            %vm1256 = vcmp.eq.s32.totalorder %v1213, %v1240
            %vm1257 = vcmp.eq.s32.totalorder %v1214, %v1239
            %vm1258 = vcmp.eq.s32.totalorder %v1214, %v1240
            %vm1259 = vcmp.eq.s32.totalorder %v1215, %v1239
            %vm1260 = vcmp.eq.s32.totalorder %v1215, %v1240
            %vm1261 = vcmp.eq.s32.totalorder %v1216, %v1239
            %vm1262 = vcmp.eq.s32.totalorder %v1216, %v1240
            %vm1263 = vcmp.eq.s32.totalorder %v1217, %v1239
            %vm1264 = vcmp.eq.s32.totalorder %v1217, %v1240
            %vm1265 = vcmp.eq.s32.totalorder %v1218, %v1239
            %vm1266 = vcmp.eq.s32.totalorder %v1218, %v1240
            %vm1267 = vcmp.eq.s32.totalorder %v1219, %v1239
            %vm1268 = vcmp.eq.s32.totalorder %v1219, %v1240
            %vm1269 = vcmp.eq.s32.totalorder %v1220, %v1239
            %vm1270 = vcmp.eq.s32.totalorder %v1220, %v1240
            %vm1271 = vcmp.eq.s32.totalorder %v1221, %v1239
            %vm1272 = vcmp.eq.s32.totalorder %v1221, %v1240
            %vm1273 = vcmp.eq.s32.totalorder %v1222, %v1239
            %vm1274 = vcmp.eq.s32.totalorder %v1222, %v1240
            %vm1275 = vcmp.eq.s32.totalorder %v1223, %v1239
            %vm1276 = vcmp.eq.s32.totalorder %v1223, %v1240
            %vm1277 = vcmp.eq.s32.totalorder %v1224, %v1239
            %vm1278 = vcmp.eq.s32.totalorder %v1224, %v1240
            %vm1279 = vcmp.eq.s32.totalorder %v1225, %v1239
            %vm1280 = vcmp.eq.s32.totalorder %v1225, %v1240
            %vm1281 = vcmp.eq.s32.totalorder %v1226, %v1239
            %vm1282 = vcmp.eq.s32.totalorder %v1226, %v1240
            %vm1283 = vcmp.eq.s32.totalorder %v1227, %v1239
            %vm1284 = vcmp.eq.s32.totalorder %v1227, %v1240
            %vm1285 = vcmp.eq.s32.totalorder %v1228, %v1239
            %vm1286 = vcmp.eq.s32.totalorder %v1228, %v1240
            %vm1287 = vcmp.eq.s32.totalorder %v1229, %v1239
            %vm1288 = vcmp.eq.s32.totalorder %v1229, %v1240
            %vm1289 = vcmp.eq.s32.totalorder %v1230, %v1239
            %vm1290 = vcmp.eq.s32.totalorder %v1230, %v1240
            %vm1291 = vcmp.eq.s32.totalorder %v1231, %v1239
            %vm1292 = vcmp.eq.s32.totalorder %v1231, %v1240
            %vm1293 = vcmp.eq.s32.totalorder %v1232, %v1239
            %vm1294 = vcmp.eq.s32.totalorder %v1232, %v1240
            %vm1295 = vcmp.eq.s32.totalorder %v1233, %v1239
            %vm1296 = vcmp.eq.s32.totalorder %v1233, %v1240
            %vm1297 = vcmp.eq.s32.totalorder %v1234, %v1239
            %vm1298 = vcmp.eq.s32.totalorder %v1234, %v1240
            %vm1299 = vcmp.eq.s32.totalorder %v1235, %v1239
            %vm1300 = vcmp.eq.s32.totalorder %v1235, %v1240
            %vm1301 = vcmp.eq.s32.totalorder %v1236, %v1239
            %vm1302 = vcmp.eq.s32.totalorder %v1236, %v1240
            %vm1303 = vcmp.eq.s32.totalorder %v1237, %v1239
            %vm1304 = vcmp.eq.s32.totalorder %v1237, %v1240
            %s1305 = smul.u32 %s25, 256
            %v1306 = vstv %s1305
            %v1307 = vadd.s32 %v1206, %v1306
            %v1308 = vadd.s32 %v1207, %v1306
            %v1309 = vadd.s32 %v1208, %v1306
            %v1310 = vadd.s32 %v1209, %v1306
            %v1311 = vadd.s32 %v1210, %v1306
            %v1312 = vadd.s32 %v1211, %v1306
            %v1313 = vadd.s32 %v1212, %v1306
            %v1314 = vadd.s32 %v1213, %v1306
            %v1315 = vadd.s32 %v1214, %v1306
            %v1316 = vadd.s32 %v1215, %v1306
            %v1317 = vadd.s32 %v1216, %v1306
            %v1318 = vadd.s32 %v1217, %v1306
            %v1319 = vadd.s32 %v1218, %v1306
            %v1320 = vadd.s32 %v1219, %v1306
            %v1321 = vadd.s32 %v1220, %v1306
            %v1322 = vadd.s32 %v1221, %v1306
            %v1323 = vadd.s32 %v1222, %v1306
            %v1324 = vadd.s32 %v1223, %v1306
            %v1325 = vadd.s32 %v1224, %v1306
            %v1326 = vadd.s32 %v1225, %v1306
            %v1327 = vadd.s32 %v1226, %v1306
            %v1328 = vadd.s32 %v1227, %v1306
            %v1329 = vadd.s32 %v1228, %v1306
            %v1330 = vadd.s32 %v1229, %v1306
            %v1331 = vadd.s32 %v1230, %v1306
            %v1332 = vadd.s32 %v1231, %v1306
            %v1333 = vadd.s32 %v1232, %v1306
            %v1334 = vadd.s32 %v1233, %v1306
            %v1335 = vadd.s32 %v1234, %v1306
            %v1336 = vadd.s32 %v1235, %v1306
            %v1337 = vadd.s32 %v1236, %v1306
            %v1338 = vadd.s32 %v1237, %v1306
            %vm1339 = vcmp.lt.s32.totalorder %v1307, 256
            %vm1340 = vcmp.lt.s32.totalorder %v1308, 256
            %vm1341 = vcmp.lt.s32.totalorder %v1309, 256
            %vm1342 = vcmp.lt.s32.totalorder %v1310, 256
            %vm1343 = vcmp.lt.s32.totalorder %v1311, 256
            %vm1344 = vcmp.lt.s32.totalorder %v1312, 256
            %vm1345 = vcmp.lt.s32.totalorder %v1313, 256
            %vm1346 = vcmp.lt.s32.totalorder %v1314, 256
            %vm1347 = vcmp.lt.s32.totalorder %v1315, 256
            %vm1348 = vcmp.lt.s32.totalorder %v1316, 256
            %vm1349 = vcmp.lt.s32.totalorder %v1317, 256
            %vm1350 = vcmp.lt.s32.totalorder %v1318, 256
            %vm1351 = vcmp.lt.s32.totalorder %v1319, 256
            %vm1352 = vcmp.lt.s32.totalorder %v1320, 256
            %vm1353 = vcmp.lt.s32.totalorder %v1321, 256
            %vm1354 = vcmp.lt.s32.totalorder %v1322, 256
            %vm1355 = vcmp.lt.s32.totalorder %v1323, 256
            %vm1356 = vcmp.lt.s32.totalorder %v1324, 256
            %vm1357 = vcmp.lt.s32.totalorder %v1325, 256
            %vm1358 = vcmp.lt.s32.totalorder %v1326, 256
            %vm1359 = vcmp.lt.s32.totalorder %v1327, 256
            %vm1360 = vcmp.lt.s32.totalorder %v1328, 256
            %vm1361 = vcmp.lt.s32.totalorder %v1329, 256
            %vm1362 = vcmp.lt.s32.totalorder %v1330, 256
            %vm1363 = vcmp.lt.s32.totalorder %v1331, 256
            %vm1364 = vcmp.lt.s32.totalorder %v1332, 256
            %vm1365 = vcmp.lt.s32.totalorder %v1333, 256
            %vm1366 = vcmp.lt.s32.totalorder %v1334, 256
            %vm1367 = vcmp.lt.s32.totalorder %v1335, 256
            %vm1368 = vcmp.lt.s32.totalorder %v1336, 256
            %vm1369 = vcmp.lt.s32.totalorder %v1337, 256
            %vm1370 = vcmp.lt.s32.totalorder %v1338, 256
            %vm1371 = vmand %vm1241, %vm1339
            %vm1372 = vmand %vm1242, %vm1339
            %vm1373 = vmand %vm1243, %vm1340
            %vm1374 = vmand %vm1244, %vm1340
            %vm1375 = vmand %vm1245, %vm1341
            %vm1376 = vmand %vm1246, %vm1341
            %vm1377 = vmand %vm1247, %vm1342
            %vm1378 = vmand %vm1248, %vm1342
            %vm1379 = vmand %vm1249, %vm1343
            %vm1380 = vmand %vm1250, %vm1343
            %vm1381 = vmand %vm1251, %vm1344
            %vm1382 = vmand %vm1252, %vm1344
            %vm1383 = vmand %vm1253, %vm1345
            %vm1384 = vmand %vm1254, %vm1345
            %vm1385 = vmand %vm1255, %vm1346
            %vm1386 = vmand %vm1256, %vm1346
            %vm1387 = vmand %vm1257, %vm1347
            %vm1388 = vmand %vm1258, %vm1347
            %vm1389 = vmand %vm1259, %vm1348
            %vm1390 = vmand %vm1260, %vm1348
            %vm1391 = vmand %vm1261, %vm1349
            %vm1392 = vmand %vm1262, %vm1349
            %vm1393 = vmand %vm1263, %vm1350
            %vm1394 = vmand %vm1264, %vm1350
            %vm1395 = vmand %vm1265, %vm1351
            %vm1396 = vmand %vm1266, %vm1351
            %vm1397 = vmand %vm1267, %vm1352
            %vm1398 = vmand %vm1268, %vm1352
            %vm1399 = vmand %vm1269, %vm1353
            %vm1400 = vmand %vm1270, %vm1353
            %vm1401 = vmand %vm1271, %vm1354
            %vm1402 = vmand %vm1272, %vm1354
            %vm1403 = vmand %vm1273, %vm1355
            %vm1404 = vmand %vm1274, %vm1355
            %vm1405 = vmand %vm1275, %vm1356
            %vm1406 = vmand %vm1276, %vm1356
            %vm1407 = vmand %vm1277, %vm1357
            %vm1408 = vmand %vm1278, %vm1357
            %vm1409 = vmand %vm1279, %vm1358
            %vm1410 = vmand %vm1280, %vm1358
            %vm1411 = vmand %vm1281, %vm1359
            %vm1412 = vmand %vm1282, %vm1359
            %vm1413 = vmand %vm1283, %vm1360
            %vm1414 = vmand %vm1284, %vm1360
            %vm1415 = vmand %vm1285, %vm1361
            %vm1416 = vmand %vm1286, %vm1361
            %vm1417 = vmand %vm1287, %vm1362
            %vm1418 = vmand %vm1288, %vm1362
            %vm1419 = vmand %vm1289, %vm1363
            %vm1420 = vmand %vm1290, %vm1363
            %vm1421 = vmand %vm1291, %vm1364
            %vm1422 = vmand %vm1292, %vm1364
            %vm1423 = vmand %vm1293, %vm1365
            %vm1424 = vmand %vm1294, %vm1365
            %vm1425 = vmand %vm1295, %vm1366
            %vm1426 = vmand %vm1296, %vm1366
            %vm1427 = vmand %vm1297, %vm1367
            %vm1428 = vmand %vm1298, %vm1367
            %vm1429 = vmand %vm1299, %vm1368
            %vm1430 = vmand %vm1300, %vm1368
            %vm1431 = vmand %vm1301, %vm1369
            %vm1432 = vmand %vm1302, %vm1369
            %vm1433 = vmand %vm1303, %vm1370
            %vm1434 = vmand %vm1304, %vm1370
            %v1435 = vsub.f32 %v974, 1.0
            %v1436 = vsub.f32 %v975, 1.0
            %v1437 = vsub.f32 %v976, 1.0
            %v1438 = vsub.f32 %v977, 1.0
            %v1439 = vsub.f32 %v978, 1.0
            %v1440 = vsub.f32 %v979, 1.0
            %v1441 = vsub.f32 %v980, 1.0
            %v1442 = vsub.f32 %v981, 1.0
            %v1443 = vsub.f32 %v982, 1.0
            %v1444 = vsub.f32 %v983, 1.0
            %v1445 = vsub.f32 %v984, 1.0
            %v1446 = vsub.f32 %v985, 1.0
            %v1447 = vsub.f32 %v986, 1.0
            %v1448 = vsub.f32 %v987, 1.0
            %v1449 = vsub.f32 %v988, 1.0
            %v1450 = vsub.f32 %v989, 1.0
            %v1451 = vsub.f32 %v990, 1.0
            %v1452 = vsub.f32 %v991, 1.0
            %v1453 = vsub.f32 %v992, 1.0
            %v1454 = vsub.f32 %v993, 1.0
            %v1455 = vsub.f32 %v994, 1.0
            %v1456 = vsub.f32 %v995, 1.0
            %v1457 = vsub.f32 %v996, 1.0
            %v1458 = vsub.f32 %v997, 1.0
            %v1459 = vsub.f32 %v998, 1.0
            %v1460 = vsub.f32 %v999, 1.0
            %v1461 = vsub.f32 %v1000, 1.0
            %v1462 = vsub.f32 %v1001, 1.0
            %v1463 = vsub.f32 %v1002, 1.0
            %v1464 = vsub.f32 %v1003, 1.0
            %v1465 = vsub.f32 %v1004, 1.0
            %v1466 = vsub.f32 %v1005, 1.0
            %v1467 = vsub.f32 %v1006, 1.0
            %v1468 = vsub.f32 %v1007, 1.0
            %v1469 = vsub.f32 %v1008, 1.0
            %v1470 = vsub.f32 %v1009, 1.0
            %v1471 = vsub.f32 %v1010, 1.0
            %v1472 = vsub.f32 %v1011, 1.0
            %v1473 = vsub.f32 %v1012, 1.0
            %v1474 = vsub.f32 %v1013, 1.0
            %v1475 = vsub.f32 %v1014, 1.0
            %v1476 = vsub.f32 %v1015, 1.0
            %v1477 = vsub.f32 %v1016, 1.0
            %v1478 = vsub.f32 %v1017, 1.0
            %v1479 = vsub.f32 %v1018, 1.0
            %v1480 = vsub.f32 %v1019, 1.0
            %v1481 = vsub.f32 %v1020, 1.0
            %v1482 = vsub.f32 %v1021, 1.0
            %v1483 = vsub.f32 %v1022, 1.0
            %v1484 = vsub.f32 %v1023, 1.0
            %v1485 = vsub.f32 %v1024, 1.0
            %v1486 = vsub.f32 %v1025, 1.0
            %v1487 = vsub.f32 %v1026, 1.0
            %v1488 = vsub.f32 %v1027, 1.0
            %v1489 = vsub.f32 %v1028, 1.0
            %v1490 = vsub.f32 %v1029, 1.0
            %v1491 = vsub.f32 %v1030, 1.0
            %v1492 = vsub.f32 %v1031, 1.0
            %v1493 = vsub.f32 %v1032, 1.0
            %v1494 = vsub.f32 %v1033, 1.0
            %v1495 = vsub.f32 %v1034, 1.0
            %v1496 = vsub.f32 %v1035, 1.0
            %v1497 = vsub.f32 %v1036, 1.0
            %v1498 = vsub.f32 %v1037, 1.0
            %v1499 = vmul.f32 %v1435, %v1435
            %v1500 = vmul.f32 %v1436, %v1436
            %v1501 = vmul.f32 %v1437, %v1437
            %v1502 = vmul.f32 %v1438, %v1438
            %v1503 = vmul.f32 %v1439, %v1439
            %v1504 = vmul.f32 %v1440, %v1440
            %v1505 = vmul.f32 %v1441, %v1441
            %v1506 = vmul.f32 %v1442, %v1442
            %v1507 = vmul.f32 %v1443, %v1443
            %v1508 = vmul.f32 %v1444, %v1444
            %v1509 = vmul.f32 %v1445, %v1445
            %v1510 = vmul.f32 %v1446, %v1446
            %v1511 = vmul.f32 %v1447, %v1447
            %v1512 = vmul.f32 %v1448, %v1448
            %v1513 = vmul.f32 %v1449, %v1449
            %v1514 = vmul.f32 %v1450, %v1450
            %v1515 = vmul.f32 %v1451, %v1451
            %v1516 = vmul.f32 %v1452, %v1452
            %v1517 = vmul.f32 %v1453, %v1453
            %v1518 = vmul.f32 %v1454, %v1454
            %v1519 = vmul.f32 %v1455, %v1455
            %v1520 = vmul.f32 %v1456, %v1456
            %v1521 = vmul.f32 %v1457, %v1457
            %v1522 = vmul.f32 %v1458, %v1458
            %v1523 = vmul.f32 %v1459, %v1459
            %v1524 = vmul.f32 %v1460, %v1460
            %v1525 = vmul.f32 %v1461, %v1461
            %v1526 = vmul.f32 %v1462, %v1462
            %v1527 = vmul.f32 %v1463, %v1463
            %v1528 = vmul.f32 %v1464, %v1464
            %v1529 = vmul.f32 %v1465, %v1465
            %v1530 = vmul.f32 %v1466, %v1466
            %v1531 = vmul.f32 %v1467, %v1467
            %v1532 = vmul.f32 %v1468, %v1468
            %v1533 = vmul.f32 %v1469, %v1469
            %v1534 = vmul.f32 %v1470, %v1470
            %v1535 = vmul.f32 %v1471, %v1471
            %v1536 = vmul.f32 %v1472, %v1472
            %v1537 = vmul.f32 %v1473, %v1473
            %v1538 = vmul.f32 %v1474, %v1474
            %v1539 = vmul.f32 %v1475, %v1475
            %v1540 = vmul.f32 %v1476, %v1476
            %v1541 = vmul.f32 %v1477, %v1477
            %v1542 = vmul.f32 %v1478, %v1478
            %v1543 = vmul.f32 %v1479, %v1479
            %v1544 = vmul.f32 %v1480, %v1480
            %v1545 = vmul.f32 %v1481, %v1481
            %v1546 = vmul.f32 %v1482, %v1482
            %v1547 = vmul.f32 %v1483, %v1483
            %v1548 = vmul.f32 %v1484, %v1484
            %v1549 = vmul.f32 %v1485, %v1485
            %v1550 = vmul.f32 %v1486, %v1486
            %v1551 = vmul.f32 %v1487, %v1487
            %v1552 = vmul.f32 %v1488, %v1488
            %v1553 = vmul.f32 %v1489, %v1489
            %v1554 = vmul.f32 %v1490, %v1490
            %v1555 = vmul.f32 %v1491, %v1491
            %v1556 = vmul.f32 %v1492, %v1492
            %v1557 = vmul.f32 %v1493, %v1493
            %v1558 = vmul.f32 %v1494, %v1494
            %v1559 = vmul.f32 %v1495, %v1495
            %v1560 = vmul.f32 %v1496, %v1496
            %v1561 = vmul.f32 %v1497, %v1497
            %v1562 = vmul.f32 %v1498, %v1498
            %v1563 = vmul.f32 %v1038, 0.0051
            %v1564 = vmul.f32 %v1039, 0.0051
            %v1565 = vmul.f32 %v1040, 0.0051
            %v1566 = vmul.f32 %v1041, 0.0051
            %v1567 = vmul.f32 %v1042, 0.0051
            %v1568 = vmul.f32 %v1043, 0.0051
            %v1569 = vmul.f32 %v1044, 0.0051
            %v1570 = vmul.f32 %v1045, 0.0051
            %v1571 = vmul.f32 %v1046, 0.0051
            %v1572 = vmul.f32 %v1047, 0.0051
            %v1573 = vmul.f32 %v1048, 0.0051
            %v1574 = vmul.f32 %v1049, 0.0051
            %v1575 = vmul.f32 %v1050, 0.0051
            %v1576 = vmul.f32 %v1051, 0.0051
            %v1577 = vmul.f32 %v1052, 0.0051
            %v1578 = vmul.f32 %v1053, 0.0051
            %v1579 = vmul.f32 %v1054, 0.0051
            %v1580 = vmul.f32 %v1055, 0.0051
            %v1581 = vmul.f32 %v1056, 0.0051
            %v1582 = vmul.f32 %v1057, 0.0051
            %v1583 = vmul.f32 %v1058, 0.0051
            %v1584 = vmul.f32 %v1059, 0.0051
            %v1585 = vmul.f32 %v1060, 0.0051
            %v1586 = vmul.f32 %v1061, 0.0051
            %v1587 = vmul.f32 %v1062, 0.0051
            %v1588 = vmul.f32 %v1063, 0.0051
            %v1589 = vmul.f32 %v1064, 0.0051
            %v1590 = vmul.f32 %v1065, 0.0051
            %v1591 = vmul.f32 %v1066, 0.0051
            %v1592 = vmul.f32 %v1067, 0.0051
            %v1593 = vmul.f32 %v1068, 0.0051
            %v1594 = vmul.f32 %v1069, 0.0051
            %v1595 = vmul.f32 %v1070, 0.0051
            %v1596 = vmul.f32 %v1071, 0.0051
            %v1597 = vmul.f32 %v1072, 0.0051
            %v1598 = vmul.f32 %v1073, 0.0051
            %v1599 = vmul.f32 %v1074, 0.0051
            %v1600 = vmul.f32 %v1075, 0.0051
            %v1601 = vmul.f32 %v1076, 0.0051
            %v1602 = vmul.f32 %v1077, 0.0051
            %v1603 = vmul.f32 %v1078, 0.0051
            %v1604 = vmul.f32 %v1079, 0.0051
            %v1605 = vmul.f32 %v1080, 0.0051
            %v1606 = vmul.f32 %v1081, 0.0051
            %v1607 = vmul.f32 %v1082, 0.0051
            %v1608 = vmul.f32 %v1083, 0.0051
            %v1609 = vmul.f32 %v1084, 0.0051
            %v1610 = vmul.f32 %v1085, 0.0051
            %v1611 = vmul.f32 %v1086, 0.0051
            %v1612 = vmul.f32 %v1087, 0.0051
            %v1613 = vmul.f32 %v1088, 0.0051
            %v1614 = vmul.f32 %v1089, 0.0051
            %v1615 = vmul.f32 %v1090, 0.0051
            %v1616 = vmul.f32 %v1091, 0.0051
            %v1617 = vmul.f32 %v1092, 0.0051
            %v1618 = vmul.f32 %v1093, 0.0051
            %v1619 = vmul.f32 %v1094, 0.0051
            %v1620 = vmul.f32 %v1095, 0.0051
            %v1621 = vmul.f32 %v1096, 0.0051
            %v1622 = vmul.f32 %v1097, 0.0051
            %v1623 = vmul.f32 %v1098, 0.0051
            %v1624 = vmul.f32 %v1099, 0.0051
            %v1625 = vmul.f32 %v1100, 0.0051
            %v1626 = vmul.f32 %v1101, 0.0051
            %v1627 = vsub.f32 %v1499, %v1563
            %v1628 = vsub.f32 %v1500, %v1564
            %v1629 = vsub.f32 %v1501, %v1565
            %v1630 = vsub.f32 %v1502, %v1566
            %v1631 = vsub.f32 %v1503, %v1567
            %v1632 = vsub.f32 %v1504, %v1568
            %v1633 = vsub.f32 %v1505, %v1569
            %v1634 = vsub.f32 %v1506, %v1570
            %v1635 = vsub.f32 %v1507, %v1571
            %v1636 = vsub.f32 %v1508, %v1572
            %v1637 = vsub.f32 %v1509, %v1573
            %v1638 = vsub.f32 %v1510, %v1574
            %v1639 = vsub.f32 %v1511, %v1575
            %v1640 = vsub.f32 %v1512, %v1576
            %v1641 = vsub.f32 %v1513, %v1577
            %v1642 = vsub.f32 %v1514, %v1578
            %v1643 = vsub.f32 %v1515, %v1579
            %v1644 = vsub.f32 %v1516, %v1580
            %v1645 = vsub.f32 %v1517, %v1581
            %v1646 = vsub.f32 %v1518, %v1582
            %v1647 = vsub.f32 %v1519, %v1583
            %v1648 = vsub.f32 %v1520, %v1584
            %v1649 = vsub.f32 %v1521, %v1585
            %v1650 = vsub.f32 %v1522, %v1586
            %v1651 = vsub.f32 %v1523, %v1587
            %v1652 = vsub.f32 %v1524, %v1588
            %v1653 = vsub.f32 %v1525, %v1589
            %v1654 = vsub.f32 %v1526, %v1590
            %v1655 = vsub.f32 %v1527, %v1591
            %v1656 = vsub.f32 %v1528, %v1592
            %v1657 = vsub.f32 %v1529, %v1593
            %v1658 = vsub.f32 %v1530, %v1594
            %v1659 = vsub.f32 %v1531, %v1595
            %v1660 = vsub.f32 %v1532, %v1596
            %v1661 = vsub.f32 %v1533, %v1597
            %v1662 = vsub.f32 %v1534, %v1598
            %v1663 = vsub.f32 %v1535, %v1599
            %v1664 = vsub.f32 %v1536, %v1600
            %v1665 = vsub.f32 %v1537, %v1601
            %v1666 = vsub.f32 %v1538, %v1602
            %v1667 = vsub.f32 %v1539, %v1603
            %v1668 = vsub.f32 %v1540, %v1604
            %v1669 = vsub.f32 %v1541, %v1605
            %v1670 = vsub.f32 %v1542, %v1606
            %v1671 = vsub.f32 %v1543, %v1607
            %v1672 = vsub.f32 %v1544, %v1608
            %v1673 = vsub.f32 %v1545, %v1609
            %v1674 = vsub.f32 %v1546, %v1610
            %v1675 = vsub.f32 %v1547, %v1611
            %v1676 = vsub.f32 %v1548, %v1612
            %v1677 = vsub.f32 %v1549, %v1613
            %v1678 = vsub.f32 %v1550, %v1614
            %v1679 = vsub.f32 %v1551, %v1615
            %v1680 = vsub.f32 %v1552, %v1616
            %v1681 = vsub.f32 %v1553, %v1617
            %v1682 = vsub.f32 %v1554, %v1618
            %v1683 = vsub.f32 %v1555, %v1619
            %v1684 = vsub.f32 %v1556, %v1620
            %v1685 = vsub.f32 %v1557, %v1621
            %v1686 = vsub.f32 %v1558, %v1622
            %v1687 = vsub.f32 %v1559, %v1623
            %v1688 = vsub.f32 %v1560, %v1624
            %v1689 = vsub.f32 %v1561, %v1625
            %v1690 = vsub.f32 %v1562, %v1626
            %v1691 = vsel %vm1371, %v1627, 0.0
            %v1692 = vsel %vm1372, %v1628, 0.0
            %v1693 = vsel %vm1373, %v1629, 0.0
            %v1694 = vsel %vm1374, %v1630, 0.0
            %v1695 = vsel %vm1375, %v1631, 0.0
            %v1696 = vsel %vm1376, %v1632, 0.0
            %v1697 = vsel %vm1377, %v1633, 0.0
            %v1698 = vsel %vm1378, %v1634, 0.0
            %v1699 = vsel %vm1379, %v1635, 0.0
            %v1700 = vsel %vm1380, %v1636, 0.0
            %v1701 = vsel %vm1381, %v1637, 0.0
            %v1702 = vsel %vm1382, %v1638, 0.0
            %v1703 = vsel %vm1383, %v1639, 0.0
            %v1704 = vsel %vm1384, %v1640, 0.0
            %v1705 = vsel %vm1385, %v1641, 0.0
            %v1706 = vsel %vm1386, %v1642, 0.0
            %v1707 = vsel %vm1387, %v1643, 0.0
            %v1708 = vsel %vm1388, %v1644, 0.0
            %v1709 = vsel %vm1389, %v1645, 0.0
            %v1710 = vsel %vm1390, %v1646, 0.0
            %v1711 = vsel %vm1391, %v1647, 0.0
            %v1712 = vsel %vm1392, %v1648, 0.0
            %v1713 = vsel %vm1393, %v1649, 0.0
            %v1714 = vsel %vm1394, %v1650, 0.0
            %v1715 = vsel %vm1395, %v1651, 0.0
            %v1716 = vsel %vm1396, %v1652, 0.0
            %v1717 = vsel %vm1397, %v1653, 0.0
            %v1718 = vsel %vm1398, %v1654, 0.0
            %v1719 = vsel %vm1399, %v1655, 0.0
            %v1720 = vsel %vm1400, %v1656, 0.0
            %v1721 = vsel %vm1401, %v1657, 0.0
            %v1722 = vsel %vm1402, %v1658, 0.0
            %v1723 = vsel %vm1403, %v1659, 0.0
            %v1724 = vsel %vm1404, %v1660, 0.0
            %v1725 = vsel %vm1405, %v1661, 0.0
            %v1726 = vsel %vm1406, %v1662, 0.0
            %v1727 = vsel %vm1407, %v1663, 0.0
            %v1728 = vsel %vm1408, %v1664, 0.0
            %v1729 = vsel %vm1409, %v1665, 0.0
            %v1730 = vsel %vm1410, %v1666, 0.0
            %v1731 = vsel %vm1411, %v1667, 0.0
            %v1732 = vsel %vm1412, %v1668, 0.0
            %v1733 = vsel %vm1413, %v1669, 0.0
            %v1734 = vsel %vm1414, %v1670, 0.0
            %v1735 = vsel %vm1415, %v1671, 0.0
            %v1736 = vsel %vm1416, %v1672, 0.0
            %v1737 = vsel %vm1417, %v1673, 0.0
            %v1738 = vsel %vm1418, %v1674, 0.0
            %v1739 = vsel %vm1419, %v1675, 0.0
            %v1740 = vsel %vm1420, %v1676, 0.0
            %v1741 = vsel %vm1421, %v1677, 0.0
            %v1742 = vsel %vm1422, %v1678, 0.0
            %v1743 = vsel %vm1423, %v1679, 0.0
            %v1744 = vsel %vm1424, %v1680, 0.0
            %v1745 = vsel %vm1425, %v1681, 0.0
            %v1746 = vsel %vm1426, %v1682, 0.0
            %v1747 = vsel %vm1427, %v1683, 0.0
            %v1748 = vsel %vm1428, %v1684, 0.0
            %v1749 = vsel %vm1429, %v1685, 0.0
            %v1750 = vsel %vm1430, %v1686, 0.0
            %v1751 = vsel %vm1431, %v1687, 0.0
            %v1752 = vsel %vm1432, %v1688, 0.0
            %v1753 = vsel %vm1433, %v1689, 0.0
            %v1754 = vsel %vm1434, %v1690, 0.0
            %v1755 = vadd.f32 %v1691, %v1693
            %v1756 = vadd.f32 %v1755, %v1695
            %v1757 = vadd.f32 %v1756, %v1697
            %v1758 = vadd.f32 %v1757, %v1699
            %v1759 = vadd.f32 %v1758, %v1701
            %v1760 = vadd.f32 %v1759, %v1703
            %v1761 = vadd.f32 %v1760, %v1705
            %v1762 = vadd.f32 %v1761, %v1707
            %v1763 = vadd.f32 %v1762, %v1709
            %v1764 = vadd.f32 %v1763, %v1711
            %v1765 = vadd.f32 %v1764, %v1713
            %v1766 = vadd.f32 %v1765, %v1715
            %v1767 = vadd.f32 %v1766, %v1717
            %v1768 = vadd.f32 %v1767, %v1719
            %v1769 = vadd.f32 %v1768, %v1721
            %v1770 = vadd.f32 %v1769, %v1723
            %v1771 = vadd.f32 %v1770, %v1725
            %v1772 = vadd.f32 %v1771, %v1727
            %v1773 = vadd.f32 %v1772, %v1729
            %v1774 = vadd.f32 %v1773, %v1731
            %v1775 = vadd.f32 %v1774, %v1733
            %v1776 = vadd.f32 %v1775, %v1735
            %v1777 = vadd.f32 %v1776, %v1737
            %v1778 = vadd.f32 %v1777, %v1739
            %v1779 = vadd.f32 %v1778, %v1741
            %v1780 = vadd.f32 %v1779, %v1743
            %v1781 = vadd.f32 %v1780, %v1745
            %v1782 = vadd.f32 %v1781, %v1747
            %v1783 = vadd.f32 %v1782, %v1749
            %v1784 = vadd.f32 %v1783, %v1751
            %v1785 = vadd.f32 %v1784, %v1753
            %v1786 = vrot.slane %v1785, 4
            %v1787 = vadd.f32 %v1785, %v1786
            %v1788 = vrot.slane %v1787, 2
            %v1789 = vadd.f32 %v1787, %v1788
            %v1790 = vrot.slane %v1789, 1
            %v1791 = vadd.f32 %v1789, %v1790
            %v1792 = vadd.f32 %v1692, %v1694
            %v1793 = vadd.f32 %v1792, %v1696
            %v1794 = vadd.f32 %v1793, %v1698
            %v1795 = vadd.f32 %v1794, %v1700
            %v1796 = vadd.f32 %v1795, %v1702
            %v1797 = vadd.f32 %v1796, %v1704
            %v1798 = vadd.f32 %v1797, %v1706
            %v1799 = vadd.f32 %v1798, %v1708
            %v1800 = vadd.f32 %v1799, %v1710
            %v1801 = vadd.f32 %v1800, %v1712
            %v1802 = vadd.f32 %v1801, %v1714
            %v1803 = vadd.f32 %v1802, %v1716
            %v1804 = vadd.f32 %v1803, %v1718
            %v1805 = vadd.f32 %v1804, %v1720
            %v1806 = vadd.f32 %v1805, %v1722
            %v1807 = vadd.f32 %v1806, %v1724
            %v1808 = vadd.f32 %v1807, %v1726
            %v1809 = vadd.f32 %v1808, %v1728
            %v1810 = vadd.f32 %v1809, %v1730
            %v1811 = vadd.f32 %v1810, %v1732
            %v1812 = vadd.f32 %v1811, %v1734
            %v1813 = vadd.f32 %v1812, %v1736
            %v1814 = vadd.f32 %v1813, %v1738
            %v1815 = vadd.f32 %v1814, %v1740
            %v1816 = vadd.f32 %v1815, %v1742
            %v1817 = vadd.f32 %v1816, %v1744
            %v1818 = vadd.f32 %v1817, %v1746
            %v1819 = vadd.f32 %v1818, %v1748
            %v1820 = vadd.f32 %v1819, %v1750
            %v1821 = vadd.f32 %v1820, %v1752
            %v1822 = vadd.f32 %v1821, %v1754
            %v1823 = vrot.slane %v1822, 4
            %v1824 = vadd.f32 %v1822, %v1823
            %v1825 = vrot.slane %v1824, 2
            %v1826 = vadd.f32 %v1824, %v1825
            %v1827 = vrot.slane %v1826, 1
            %v1828 = vadd.f32 %v1826, %v1827
            %v1829 = vld [vmem:[#allocation8] sm:$0x3]
            %v1832 = vcombine.low %v1791, %v1828
            %v1834 = vunpack.c.l.s4 1966171168
            %v1835 = vunpack.c.0.s8 %v1834
            %v1836 = vlaneseq
            %v1837 = vshrl.u32 %v1836, 7
            %v1838 = vsub.s32 %v1835, %v1837
            %v1839 = vrot.slane %v1832, %v1838
            %v1841 = vunpack.c.l.s4 1966171168
            %v1842 = vunpack.c.0.s8 %v1841
            %v1843 = vlaneseq
            %v1844 = vshrl.u32 %v1843, 7
            %v1845 = vsub.s32 %v1842, %v1844
            %v1846 = vrot.slane %v1839, %v1845
            %v1848 = vadd.f32 %v1829, %v1846
            %1849 = vst.msk [vmem:[#allocation8] sm:$0x3] %vm1199, %v1848
          $region48: #{tpu_custom_call.1} parent=43 // pred_fallthru
            _
        $region44: #{tpu_custom_call.1} parent=27 // pred_fallthru
          _
        // Predicated region
        $region49: #{tpu_custom_call.1} parent=27 // pred_check
          %p1850 = pneg %p115
        $region50: #{tpu_custom_call.1} parent=27 // pred_check_branch
          %1852 = sbr.rel (%p1850) target = $region52
        $region51: #{tpu_custom_call.1} parent=27 // pred_region
          %s1854 = ssub.s32 32, 32
          %1855 = vsyncadd [#allocation5], %s1854
          %s1856 = smul.addr %s26, 2
          %s1857 = smul.addr %s25, 2
          %s1858 = sadd.s32 %s1856, %s1857
          %s1859 = smul.addr %s1858, 16
          %s1860 = scalar_lea.hbm %s2, %s1859
          %s1862 = sshll.u32 [#allocation8], 4
          %s1863 = int_to_ptr.vmem [resolvable:$true] %s1862
          %1865 = dma.vmem_to_hbm [thread:$0]  %s1863, 32, %s1860, [#allocation5]
        $region52: #{tpu_custom_call.1} parent=27 // pred_fallthru
          _
        // Predicated region
        $region53: #{tpu_custom_call.1} parent=27 // pred_check
          %p1866 = pneg %p115
        $region54: #{tpu_custom_call.1} parent=27 // pred_check_branch
          %1868 = sbr.rel (%p1866) target = $region56
        $region55: #{tpu_custom_call.1} parent=27 // pred_region
          %1869 = dma.done [#allocation5], 32
        $region56: #{tpu_custom_call.1} parent=27 // pred_fallthru
          _
      $region28: #{tpu_custom_call.1} parent=5 // pred_fallthru
        _
      %p1870 = scmp.le.s32.totalorder 2, %s15
      // Predicated region
      $region57: #{tpu_custom_call.1} parent=5 // pred_check
        %p1871 = pneg %p1870
      $region58: #{tpu_custom_call.1} parent=5 // pred_check_branch
        %1873 = sbr.rel (%p1871) target = $region60
      $region59: #{tpu_custom_call.1} parent=5 // pred_region
        %s1874 = ssub.s32 %s15, 2
      $region60: #{tpu_custom_call.1} parent=5 // pred_fallthru
        _
    $region6: #{tpu_custom_call.1} parent=1 // loop_footer
      %s19 = sadd.s32 1, %s15
    $region7: #{tpu_custom_call.1} parent=1 // loop_footer_branch
      %14 = sbr.rel target = $region3
    $region8: #{tpu_custom_call.1} parent=1 // loop_exit
      _
    %1875 = vsyncpa [#allocation4], 1
    %s1876 = scalar_lea.sflag [#allocation4], 1
    %1877 = vsyncpa %s1876, 1
    %1878 = vsyncpa [#allocation7], 1
    %s1879 = scalar_lea.sflag [#allocation7], 1
    %1880 = vsyncpa %s1879, 1
    %1881 = vsyncpa [#allocation5], 1
    %s1882 = scalar_lea.sflag [#allocation5], 1
    %1883 = vsyncpa %s1882, 1

</llo_original>
